<compile_context>
chip_gen: v5e
topology: v5e:2x2
jax: 0.10.0
libtpu: 0.0.40
codegen_flags: <defaults>
</compile_context>

<pallas_src>
import functools

import jax
import jax.numpy as jnp
from jax import lax
from jax.experimental import pallas as pl
from jax.experimental.pallas import tpu as pltpu


# ----------------------------------------------------------------------------
# Kernel 1: one bidirectional LSTM layer (sequential recurrence inside kernel)
# ----------------------------------------------------------------------------
def bilstm_layer_kernel(x_ref, wih_ref, whh_ref, b_ref,
                        outf_ref, outb_ref,
                        gx, *, unroll):
    T, B, H = outf_ref.shape
    G = 4 * H

    # ---- hoisted, fused input projection: ONE big MXU matmul for both dirs --
    # x_ref is time-major 2-D (T*B, E); wih_ref is (E, 8H) = [fwd 4H | bwd 4H].
    gx[...] = jnp.dot(x_ref[...], wih_ref[...],
                      preferred_element_type=jnp.float32) + b_ref[...]

    whh = whh_ref[...]          # loop-invariant (2H, 8H) block-diag weight

    def cell(gates, c_prev):
        # Gate layout (reordered in the wrapper): [i | f | o | g].
        sig = jax.nn.sigmoid(gates[:, 0:3 * H])      # one wide EUP call (i,f,o)
        g = jnp.tanh(gates[:, 3 * H:4 * H])
        i = sig[:, 0:H]
        f = sig[:, H:2 * H]
        o = sig[:, 2 * H:3 * H]
        c_new = f * c_prev + i * g
        h_new = o * jnp.tanh(c_new)
        return h_new, c_new

    def step(t, hf, cf, hb, cb):
        # Forward (time t) and backward (time T-1-t) chains share one matmul.
        s = T - 1 - t
        h_comb = jnp.concatenate([hf, hb], axis=1)                 # (B, 2H)
        hid = jnp.dot(h_comb, whh, preferred_element_type=jnp.float32)  # (B, 8H)
        gates_f = gx[pl.ds(t * B, B), 0:G] + hid[:, 0:G]
        gates_b = gx[pl.ds(s * B, B), G:2 * G] + hid[:, G:2 * G]
        hf, cf = cell(gates_f, cf)
        hb, cb = cell(gates_b, cb)
        outf_ref[t] = hf          # full-width per-timestep store
        outb_ref[s] = hb
        return hf, cf, hb, cb

    zeros = jnp.zeros((B, H), jnp.float32)
    carry = (zeros, zeros, zeros, zeros)
    if unroll:
        # Full unroll: static indices + full cross-iteration scheduler visibility.
        for t in range(T):
            carry = step(t, *carry)
    else:
        # TODO(synk): for very long sequences use a modest unroll factor and
        # tile over T (with h/c carried across grid steps) for v7x's 64 MiB VMEM.
        lax.fori_loop(0, T, lambda t, c: step(t, *c), carry)


def bilstm_layer(x_tbe, wih, whh, b, hidden_dim):
    """x_tbe: (T, B, E).  wih: (E, 8H) [fwd|bwd], whh: (2H, 8H) block-diag,
    b: (1, 8H).  Returns (out_fwd, out_bwd), each (T, B, H)."""
    T, B, E = x_tbe.shape
    H = hidden_dim
    G = 4 * H

    x_2d = x_tbe.reshape(T * B, E)          # free wrapper-side reshape (time-major)
    kern = functools.partial(bilstm_layer_kernel, unroll=(T <= 64))

    # TODO(synk): for production sizes add a "parallel" batch-grid axis (v7x
    # 2-TC split) and bf16 weight/activation casts; kept f32 and grid-less
    # here for exactness at tiny demo shapes.
    return pl.pallas_call(
        kern,
        out_shape=(jax.ShapeDtypeStruct((T, B, H), jnp.float32),
                   jax.ShapeDtypeStruct((T, B, H), jnp.float32)),
        in_specs=[pl.BlockSpec(memory_space=pltpu.MemorySpace.VMEM)] * 4,
        out_specs=(pl.BlockSpec(memory_space=pltpu.MemorySpace.VMEM),
                   pl.BlockSpec(memory_space=pltpu.MemorySpace.VMEM)),
        scratch_shapes=[
            pltpu.VMEM((T * B, 2 * G), jnp.float32),   # gx (hoisted input proj)
        ],
    )(x_2d, wih, whh, b)


# ----------------------------------------------------------------------------
# Kernel 2: fc1 -> ELU -> fc2 head, fully 2-D on (T*B, .), lane-padded outputs
# ----------------------------------------------------------------------------
def head_kernel(xf_ref, xb_ref, w1f_ref, w1b_ref, b1_ref, w2_ref, b2_ref,
                out_ref):
    # fc1 split into fwd/bwd halves -> no concat of the LSTM outputs needed.
    h = (jnp.dot(xf_ref[...], w1f_ref[...], preferred_element_type=jnp.float32)
         + jnp.dot(xb_ref[...], w1b_ref[...], preferred_element_type=jnp.float32)
         + b1_ref[...])
    # ELU (alpha = 1.0)
    h = jnp.where(h > 0, h, jnp.exp(jnp.minimum(h, 0.0)) - 1.0)
    out_ref[...] = (jnp.dot(h, w2_ref[...], preferred_element_type=jnp.float32)
                    + b2_ref[...])


def head(xf_tbh, xb_tbh, w1f, w1b, b1, w2, b2):
    T, B, H = xf_tbh.shape
    N = T * B
    O_pad = w2.shape[1]
    out = pl.pallas_call(
        head_kernel,
        out_shape=jax.ShapeDtypeStruct((N, O_pad), jnp.float32),
        in_specs=[pl.BlockSpec(memory_space=pltpu.MemorySpace.VMEM)] * 7,
        out_specs=pl.BlockSpec(memory_space=pltpu.MemorySpace.VMEM),
    )(xf_tbh.reshape(N, H), xb_tbh.reshape(N, H), w1f, w1b, b1, w2, b2)
    return out.reshape(T, B, O_pad)


# ----------------------------------------------------------------------------
# Parameter init (PyTorch layout) + wrapper-side weight re-layout
# ----------------------------------------------------------------------------
def init_params(key, vocab_size, embedding_dim, hidden_dim,
                first_output_dim, output_dim, num_layers):
    ks = iter(jax.random.split(key, 8 * num_layers + 8))
    u = lambda k, shape, s: jax.random.uniform(k, shape, jnp.float32, -s, s)

    emb = jax.random.normal(next(ks), (vocab_size, embedding_dim), jnp.float32)
    emb = emb.at[0].set(0.0)                             # padding_idx = 0

    s = 1.0 / jnp.sqrt(hidden_dim)
    layers = []
    for l in range(num_layers):
        in_dim = embedding_dim if l == 0 else 2 * hidden_dim
        layer = {}
        for d in ("f", "b"):
            wih = u(next(ks), (4 * hidden_dim, in_dim), s)
            whh = u(next(ks), (4 * hidden_dim, hidden_dim), s)
            bih = u(next(ks), (4 * hidden_dim,), s)
            bhh = u(next(ks), (4 * hidden_dim,), s)
            layer[d] = (wih, whh, (bih + bhh).reshape(1, -1))
        layers.append(layer)

    s1 = 1.0 / jnp.sqrt(2 * hidden_dim)
    fc1_w = u(next(ks), (first_output_dim, 2 * hidden_dim), s1)
    fc1_b = u(next(ks), (1, first_output_dim), s1)
    s2 = 1.0 / jnp.sqrt(first_output_dim)
    fc2_w = u(next(ks), (output_dim, first_output_dim), s2)
    fc2_b = u(next(ks), (1, output_dim), s2)

    return dict(emb=emb, layers=layers,
                fc1_w=fc1_w, fc1_b=fc1_b, fc2_w=fc2_w, fc2_b=fc2_b)


def _prep_lstm_dir(wih, whh, bias, hidden_dim):
    """PyTorch (i,f,g,o)-ordered (4H, in) weights -> kernel layout:
    gate order [i,f,o,g], pre-transposed to (in, 4H) / (H, 4H) / (1, 4H)."""
    H = hidden_dim

    def reorder_rows(w):
        return jnp.concatenate([w[0:H], w[H:2 * H], w[3 * H:4 * H],
                                w[2 * H:3 * H]], axis=0)

    wih_t = reorder_rows(wih).T
    whh_t = reorder_rows(whh).T
    b = jnp.concatenate([bias[:, 0:H], bias[:, H:2 * H],
                         bias[:, 3 * H:4 * H], bias[:, 2 * H:3 * H]], axis=1)
    return wih_t, whh_t, b


def _prep_bilstm_layer(layer, hidden_dim):
    """Fuse both directions' weights: wih (in, 8H) = [fwd | bwd],
    whh (2H, 8H) block-diagonal, bias (1, 8H)."""
    H = hidden_dim
    G = 4 * H
    wih_f, whh_f, b_f = _prep_lstm_dir(*layer["f"], H)
    wih_b, whh_b, b_b = _prep_lstm_dir(*layer["b"], H)
    wih = jnp.concatenate([wih_f, wih_b], axis=1)                 # (in, 8H)
    b = jnp.concatenate([b_f, b_b], axis=1)                       # (1, 8H)
    zero = jnp.zeros((H, G), jnp.float32)
    whh = jnp.concatenate(
        [jnp.concatenate([whh_f, zero], axis=1),
         jnp.concatenate([zero, whh_b], axis=1)], axis=0)         # (2H, 8H)
    return wih, whh, b


def _pad_last(x, axis, mult):
    pad = (-x.shape[axis]) % mult
    if pad == 0:
        return x
    widths = [(0, 0)] * x.ndim
    widths[axis] = (0, pad)
    return jnp.pad(x, widths)


def _prep_head(fc1_w, fc1_b, fc2_w, fc2_b, hidden_dim):
    """Split fc1 into fwd/bwd halves, pre-transpose, pad FC1/O dims to 128
    lanes so all head matmuls/stores are lane-dense (zero-padding is exact:
    ELU(0)=0 and padded fc2 rows are zero)."""
    H = hidden_dim
    O = fc2_w.shape[0]
    w1f = _pad_last(fc1_w[:, :H].T, 1, 128)              # (H, FC1_pad)
    w1b = _pad_last(fc1_w[:, H:].T, 1, 128)              # (H, FC1_pad)
    b1 = _pad_last(fc1_b, 1, 128)                        # (1, FC1_pad)
    w2 = _pad_last(_pad_last(fc2_w.T, 0, 128), 1, 128)   # (FC1_pad, O_pad)
    b2 = _pad_last(fc2_b, 1, 128)                        # (1, O_pad)
    return w1f, w1b, b1, w2, b2, O


# ----------------------------------------------------------------------------
# BLSTM module forward (parameters + glue in plain JAX)
# ----------------------------------------------------------------------------
def blstm_forward(params, tokens, hidden_dim):
    H = hidden_dim
    # embedding gather + dropout (identity, eval mode) stay in XLA glue.
    embedded = jnp.take(params["emb"], tokens, axis=0)   # (B, T, E)
    x = jnp.transpose(embedded, (1, 0, 2))               # (T, B, E) time-major

    outf = outb = None
    for li, layer in enumerate(params["layers"]):
        if li > 0:
            x = jnp.concatenate([outf, outb], axis=-1)   # (T, B, 2H)
        wih, whh, b = _prep_bilstm_layer(layer, H)
        outf, outb = bilstm_layer(x, wih, whh, b, H)

    w1f, w1b, b1, w2, b2, O = _prep_head(params["fc1_w"], params["fc1_b"],
                                         params["fc2_w"], params["fc2_b"], H)
    preds = head(outf, outb, w1f, w1b, b1, w2, b2)       # (T, B, O_pad)
    return jnp.transpose(preds[:, :, :O], (1, 0, 2))     # (B, T, O)


# ----------------------------------------------------------------------------
# Pure-JAX reference (for numerical check)
# ----------------------------------------------------------------------------
def _lstm_dir_ref(x_tbe, wih, whh, b, reverse):
    T, B, _ = x_tbe.shape
    H = whh.shape[1]

    def step(carry, x_t):
        h, c = carry
        gates = x_t @ wih.T + h @ whh.T + b[0]
        i, f, g, o = jnp.split(gates, 4, axis=-1)
        c = jax.nn.sigmoid(f) * c + jax.nn.sigmoid(i) * jnp.tanh(g)
        h = jax.nn.sigmoid(o) * jnp.tanh(c)
        return (h, c), h

    xs = x_tbe[::-1] if reverse else x_tbe
    _, hs = lax.scan(step, (jnp.zeros((B, H)), jnp.zeros((B, H))), xs)
    return hs[::-1] if reverse else hs


def blstm_forward_ref(params, tokens, hidden_dim):
    x = jnp.transpose(jnp.take(params["emb"], tokens, axis=0), (1, 0, 2))
    for layer in params["layers"]:
        fwd = _lstm_dir_ref(x, *layer["f"], reverse=False)
        bwd = _lstm_dir_ref(x, *layer["b"], reverse=True)
        x = jnp.concatenate([fwd, bwd], axis=-1)
    h = x @ params["fc1_w"].T + params["fc1_b"][0]
    h = jnp.where(h > 0, h, jnp.expm1(h))
    out = h @ params["fc2_w"].T + params["fc2_b"][0]
    return jnp.transpose(out, (1, 0, 2))


if __name__ == "__main__":
    # small shapes consistent with the module
    VOCAB, EMB, HID = 50, 16, 32
    FC1, OUT = 24, 5
    NUM_LAYERS = 1          # wrapper loop supports >1 (concat between layers)
    B, T = 2, 8

    key = jax.random.PRNGKey(0)
    k_params, k_tok = jax.random.split(key)
    params = init_params(k_params, VOCAB, EMB, HID, FC1, OUT, NUM_LAYERS)
    tokens = jax.random.randint(k_tok, (B, T), 0, VOCAB, dtype=jnp.int32)

    preds = blstm_forward(params, tokens, HID)
    preds = jax.block_until_ready(preds)

    ref = blstm_forward_ref(params, tokens, HID)
    assert preds.shape == (B, T, OUT)
    assert jnp.max(jnp.abs(preds - ref)) < 1e-4, "mismatch vs. reference"

    print("KERNEL_OK")
</pallas_src>

<mosaic_0001>
module attributes {stable_mosaic.version = 11 : i64} {
  func.func @bilstm_layer_kernel(%arg0: memref<16x16xf32, #tpu.memory_space<vmem>>, %arg1: memref<16x256xf32, #tpu.memory_space<vmem>>, %arg2: memref<64x256xf32, #tpu.memory_space<vmem>>, %arg3: memref<1x256xf32, #tpu.memory_space<vmem>>, %arg4: memref<8x2x32xf32, #tpu.memory_space<vmem>>, %arg5: memref<8x2x32xf32, #tpu.memory_space<vmem>>, %arg6: memref<16x256xf32, #tpu.memory_space<vmem>>) attributes {dimension_semantics = [], scalar_prefetch = 0 : i64, scratch_operands = 1 : i64, tpu.core_type = #tpu.core_type<tc>} {
    %c0 = arith.constant 0 : index
    %c0_0 = arith.constant 0 : index
    %0 = vector.load %arg0[%c0, %c0_0] : memref<16x16xf32, #tpu.memory_space<vmem>>, vector<16x16xf32>
    %c0_1 = arith.constant 0 : index
    %c0_2 = arith.constant 0 : index
    %1 = vector.load %arg1[%c0_1, %c0_2] : memref<16x256xf32, #tpu.memory_space<vmem>>, vector<16x256xf32>
    %cst = arith.constant dense<0.000000e+00> : vector<16x256xf32>
    %2 = tpu.matmul %0, %1, %cst {dimension_numbers = #tpu.dot_dimension_numbers<[1], [0], [0], [1], [0, 0, 1, 1], [], []>} : vector<16x16xf32>, vector<16x256xf32>, vector<16x256xf32> -> vector<16x256xf32>
    %c0_3 = arith.constant 0 : index
    %c0_4 = arith.constant 0 : index
    %3 = vector.load %arg3[%c0_3, %c0_4] : memref<1x256xf32, #tpu.memory_space<vmem>>, vector<1x256xf32>
    %4 = vector.broadcast %3 : vector<1x256xf32> to vector<16x256xf32>
    %5 = arith.addf %2, %4 : vector<16x256xf32>
    %c0_5 = arith.constant 0 : index
    %c0_6 = arith.constant 0 : index
    %6 = vector.load %arg6[%c0_5, %c0_6] : memref<16x256xf32, #tpu.memory_space<vmem>>, vector<16x256xf32>
    tpu.vector_store %arg6[%c0_5, %c0_6], %5 {strides = array<i32>} : memref<16x256xf32, #tpu.memory_space<vmem>>, vector<16x256xf32>,
    %c0_7 = arith.constant 0 : index
    %c0_8 = arith.constant 0 : index
    %7 = vector.load %arg2[%c0_7, %c0_8] : memref<64x256xf32, #tpu.memory_space<vmem>>, vector<64x256xf32>
    %cst_9 = arith.constant 0.000000e+00 : f32
    %8 = vector.broadcast %cst_9 : f32 to vector<2x32xf32>
    %9 = tpu.concatenate %8, %8 in 1 : vector<2x32xf32>, vector<2x32xf32> -> vector<2x64xf32>
    %cst_10 = arith.constant dense<0.000000e+00> : vector<2x256xf32>
    %10 = tpu.matmul %9, %7, %cst_10 {dimension_numbers = #tpu.dot_dimension_numbers<[1], [0], [0], [1], [0, 0, 1, 1], [], []>} : vector<2x64xf32>, vector<64x256xf32>, vector<2x256xf32> -> vector<2x256xf32>
    %c0_11 = arith.constant 0 : index
    %c0_12 = arith.constant 0 : index
    %11 = vector.load %arg6[%c0_11, %c0_12] : memref<16x256xf32, #tpu.memory_space<vmem>>, vector<2x128xf32>
    %12 = vector.extract_strided_slice %10 {offsets = [0, 0], sizes = [2, 128], strides = [1, 1]} : vector<2x256xf32> to vector<2x128xf32>
    %13 = arith.addf %11, %12 : vector<2x128xf32>
    %c14 = arith.constant 14 : index
    %c128 = arith.constant 128 : index
    %14 = vector.load %arg6[%c14, %c128] : memref<16x256xf32, #tpu.memory_space<vmem>>, vector<2x128xf32>
    %15 = vector.extract_strided_slice %10 {offsets = [0, 128], sizes = [2, 128], strides = [1, 1]} : vector<2x256xf32> to vector<2x128xf32>
    %16 = arith.addf %14, %15 : vector<2x128xf32>
    %17 = vector.extract_strided_slice %13 {offsets = [0, 0], sizes = [2, 96], strides = [1, 1]} : vector<2x128xf32> to vector<2x96xf32>
    %18 = arith.negf %17 : vector<2x96xf32>
    %19 = math.exp %18 : vector<2x96xf32>
    %cst_13 = arith.constant 1.000000e+00 : f32
    %20 = vector.broadcast %cst_13 : f32 to vector<2x96xf32>
    %21 = arith.addf %20, %19 : vector<2x96xf32>
    %22 = arith.divf %20, %21 : vector<2x96xf32>
    %23 = vector.extract_strided_slice %13 {offsets = [0, 96], sizes = [2, 32], strides = [1, 1]} : vector<2x128xf32> to vector<2x32xf32>
    %24 = math.tanh %23 : vector<2x32xf32>
    %25 = vector.extract_strided_slice %22 {offsets = [0, 0], sizes = [2, 32], strides = [1, 1]} : vector<2x96xf32> to vector<2x32xf32>
    %26 = vector.extract_strided_slice %22 {offsets = [0, 32], sizes = [2, 32], strides = [1, 1]} : vector<2x96xf32> to vector<2x32xf32>
    %27 = vector.extract_strided_slice %22 {offsets = [0, 64], sizes = [2, 32], strides = [1, 1]} : vector<2x96xf32> to vector<2x32xf32>
    %28 = arith.mulf %26, %8 : vector<2x32xf32>
    %29 = arith.mulf %25, %24 : vector<2x32xf32>
    %30 = arith.addf %28, %29 : vector<2x32xf32>
    %31 = math.tanh %30 : vector<2x32xf32>
    %32 = arith.mulf %27, %31 : vector<2x32xf32>
    %33 = vector.extract_strided_slice %16 {offsets = [0, 0], sizes = [2, 96], strides = [1, 1]} : vector<2x128xf32> to vector<2x96xf32>
    %34 = arith.negf %33 : vector<2x96xf32>
    %35 = math.exp %34 : vector<2x96xf32>
    %cst_14 = arith.constant 1.000000e+00 : f32
    %36 = vector.broadcast %cst_14 : f32 to vector<2x96xf32>
    %37 = arith.addf %36, %35 : vector<2x96xf32>
    %38 = arith.divf %36, %37 : vector<2x96xf32>
    %39 = vector.extract_strided_slice %16 {offsets = [0, 96], sizes = [2, 32], strides = [1, 1]} : vector<2x128xf32> to vector<2x32xf32>
    %40 = math.tanh %39 : vector<2x32xf32>
    %41 = vector.extract_strided_slice %38 {offsets = [0, 0], sizes = [2, 32], strides = [1, 1]} : vector<2x96xf32> to vector<2x32xf32>
    %42 = vector.extract_strided_slice %38 {offsets = [0, 32], sizes = [2, 32], strides = [1, 1]} : vector<2x96xf32> to vector<2x32xf32>
    %43 = vector.extract_strided_slice %38 {offsets = [0, 64], sizes = [2, 32], strides = [1, 1]} : vector<2x96xf32> to vector<2x32xf32>
    %44 = arith.mulf %42, %8 : vector<2x32xf32>
    %45 = arith.mulf %41, %40 : vector<2x32xf32>
    %46 = arith.addf %44, %45 : vector<2x32xf32>
    %47 = math.tanh %46 : vector<2x32xf32>
    %48 = arith.mulf %43, %47 : vector<2x32xf32>
    %c0_15 = arith.constant 0 : index
    %c0_16 = arith.constant 0 : index
    %c0_17 = arith.constant 0 : index
    %49 = vector.load %arg4[%c0_15, %c0_16, %c0_17] : memref<8x2x32xf32, #tpu.memory_space<vmem>>, vector<1x2x32xf32>
    %50 = vector.shape_cast %49 : vector<1x2x32xf32> to vector<2x32xf32>
    %51 = vector.shape_cast %32 : vector<2x32xf32> to vector<1x2x32xf32>
    tpu.vector_store %arg4[%c0_15, %c0_16, %c0_17], %51 {strides = array<i32>} : memref<8x2x32xf32, #tpu.memory_space<vmem>>, vector<1x2x32xf32>,
    %c7 = arith.constant 7 : index
    %c0_18 = arith.constant 0 : index
    %c0_19 = arith.constant 0 : index
    %52 = vector.load %arg5[%c7, %c0_18, %c0_19] : memref<8x2x32xf32, #tpu.memory_space<vmem>>, vector<1x2x32xf32>
    %53 = vector.shape_cast %52 : vector<1x2x32xf32> to vector<2x32xf32>
    %54 = vector.shape_cast %48 : vector<2x32xf32> to vector<1x2x32xf32>
    tpu.vector_store %arg5[%c7, %c0_18, %c0_19], %54 {strides = array<i32>} : memref<8x2x32xf32, #tpu.memory_space<vmem>>, vector<1x2x32xf32>,
    %55 = tpu.concatenate %32, %48 in 1 : vector<2x32xf32>, vector<2x32xf32> -> vector<2x64xf32>
    %cst_20 = arith.constant dense<0.000000e+00> : vector<2x256xf32>
    %56 = tpu.matmul %55, %7, %cst_20 {dimension_numbers = #tpu.dot_dimension_numbers<[1], [0], [0], [1], [0, 0, 1, 1], [], []>} : vector<2x64xf32>, vector<64x256xf32>, vector<2x256xf32> -> vector<2x256xf32>
    %c2 = arith.constant 2 : index
    %c0_21 = arith.constant 0 : index
    %57 = vector.load %arg6[%c2, %c0_21] : memref<16x256xf32, #tpu.memory_space<vmem>>, vector<2x128xf32>
    %58 = vector.extract_strided_slice %56 {offsets = [0, 0], sizes = [2, 128], strides = [1, 1]} : vector<2x256xf32> to vector<2x128xf32>
    %59 = arith.addf %57, %58 : vector<2x128xf32>
    %c12 = arith.constant 12 : index
    %c128_22 = arith.constant 128 : index
    %60 = vector.load %arg6[%c12, %c128_22] : memref<16x256xf32, #tpu.memory_space<vmem>>, vector<2x128xf32>
    %61 = vector.extract_strided_slice %56 {offsets = [0, 128], sizes = [2, 128], strides = [1, 1]} : vector<2x256xf32> to vector<2x128xf32>
    %62 = arith.addf %60, %61 : vector<2x128xf32>
    %63 = vector.extract_strided_slice %59 {offsets = [0, 0], sizes = [2, 96], strides = [1, 1]} : vector<2x128xf32> to vector<2x96xf32>
    %64 = arith.negf %63 : vector<2x96xf32>
    %65 = math.exp %64 : vector<2x96xf32>
    %cst_23 = arith.constant 1.000000e+00 : f32
    %66 = vector.broadcast %cst_23 : f32 to vector<2x96xf32>
    %67 = arith.addf %66, %65 : vector<2x96xf32>
    %68 = arith.divf %66, %67 : vector<2x96xf32>
    %69 = vector.extract_strided_slice %59 {offsets = [0, 96], sizes = [2, 32], strides = [1, 1]} : vector<2x128xf32> to vector<2x32xf32>
    %70 = math.tanh %69 : vector<2x32xf32>
    %71 = vector.extract_strided_slice %68 {offsets = [0, 0], sizes = [2, 32], strides = [1, 1]} : vector<2x96xf32> to vector<2x32xf32>
    %72 = vector.extract_strided_slice %68 {offsets = [0, 32], sizes = [2, 32], strides = [1, 1]} : vector<2x96xf32> to vector<2x32xf32>
    %73 = vector.extract_strided_slice %68 {offsets = [0, 64], sizes = [2, 32], strides = [1, 1]} : vector<2x96xf32> to vector<2x32xf32>
    %74 = arith.mulf %72, %30 : vector<2x32xf32>
    %75 = arith.mulf %71, %70 : vector<2x32xf32>
    %76 = arith.addf %74, %75 : vector<2x32xf32>
    %77 = math.tanh %76 : vector<2x32xf32>
    %78 = arith.mulf %73, %77 : vector<2x32xf32>
    %79 = vector.extract_strided_slice %62 {offsets = [0, 0], sizes = [2, 96], strides = [1, 1]} : vector<2x128xf32> to vector<2x96xf32>
    %80 = arith.negf %79 : vector<2x96xf32>
    %81 = math.exp %80 : vector<2x96xf32>
    %cst_24 = arith.constant 1.000000e+00 : f32
    %82 = vector.broadcast %cst_24 : f32 to vector<2x96xf32>
    %83 = arith.addf %82, %81 : vector<2x96xf32>
    %84 = arith.divf %82, %83 : vector<2x96xf32>
    %85 = vector.extract_strided_slice %62 {offsets = [0, 96], sizes = [2, 32], strides = [1, 1]} : vector<2x128xf32> to vector<2x32xf32>
    %86 = math.tanh %85 : vector<2x32xf32>
    %87 = vector.extract_strided_slice %84 {offsets = [0, 0], sizes = [2, 32], strides = [1, 1]} : vector<2x96xf32> to vector<2x32xf32>
    %88 = vector.extract_strided_slice %84 {offsets = [0, 32], sizes = [2, 32], strides = [1, 1]} : vector<2x96xf32> to vector<2x32xf32>
    %89 = vector.extract_strided_slice %84 {offsets = [0, 64], sizes = [2, 32], strides = [1, 1]} : vector<2x96xf32> to vector<2x32xf32>
    %90 = arith.mulf %88, %46 : vector<2x32xf32>
    %91 = arith.mulf %87, %86 : vector<2x32xf32>
    %92 = arith.addf %90, %91 : vector<2x32xf32>
    %93 = math.tanh %92 : vector<2x32xf32>
    %94 = arith.mulf %89, %93 : vector<2x32xf32>
    %c1 = arith.constant 1 : index
    %c0_25 = arith.constant 0 : index
    %c0_26 = arith.constant 0 : index
    %95 = vector.load %arg4[%c1, %c0_25, %c0_26] : memref<8x2x32xf32, #tpu.memory_space<vmem>>, vector<1x2x32xf32>
    %96 = vector.shape_cast %95 : vector<1x2x32xf32> to vector<2x32xf32>
    %97 = vector.shape_cast %78 : vector<2x32xf32> to vector<1x2x32xf32>
    tpu.vector_store %arg4[%c1, %c0_25, %c0_26], %97 {strides = array<i32>} : memref<8x2x32xf32, #tpu.memory_space<vmem>>, vector<1x2x32xf32>,
    %c6 = arith.constant 6 : index
    %c0_27 = arith.constant 0 : index
    %c0_28 = arith.constant 0 : index
    %98 = vector.load %arg5[%c6, %c0_27, %c0_28] : memref<8x2x32xf32, #tpu.memory_space<vmem>>, vector<1x2x32xf32>
    %99 = vector.shape_cast %98 : vector<1x2x32xf32> to vector<2x32xf32>
    %100 = vector.shape_cast %94 : vector<2x32xf32> to vector<1x2x32xf32>
    tpu.vector_store %arg5[%c6, %c0_27, %c0_28], %100 {strides = array<i32>} : memref<8x2x32xf32, #tpu.memory_space<vmem>>, vector<1x2x32xf32>,
    %101 = tpu.concatenate %78, %94 in 1 : vector<2x32xf32>, vector<2x32xf32> -> vector<2x64xf32>
    %cst_29 = arith.constant dense<0.000000e+00> : vector<2x256xf32>
    %102 = tpu.matmul %101, %7, %cst_29 {dimension_numbers = #tpu.dot_dimension_numbers<[1], [0], [0], [1], [0, 0, 1, 1], [], []>} : vector<2x64xf32>, vector<64x256xf32>, vector<2x256xf32> -> vector<2x256xf32>
    %c4 = arith.constant 4 : index
    %c0_30 = arith.constant 0 : index
    %103 = vector.load %arg6[%c4, %c0_30] : memref<16x256xf32, #tpu.memory_space<vmem>>, vector<2x128xf32>
    %104 = vector.extract_strided_slice %102 {offsets = [0, 0], sizes = [2, 128], strides = [1, 1]} : vector<2x256xf32> to vector<2x128xf32>
    %105 = arith.addf %103, %104 : vector<2x128xf32>
    %c10 = arith.constant 10 : index
    %c128_31 = arith.constant 128 : index
    %106 = vector.load %arg6[%c10, %c128_31] : memref<16x256xf32, #tpu.memory_space<vmem>>, vector<2x128xf32>
    %107 = vector.extract_strided_slice %102 {offsets = [0, 128], sizes = [2, 128], strides = [1, 1]} : vector<2x256xf32> to vector<2x128xf32>
    %108 = arith.addf %106, %107 : vector<2x128xf32>
    %109 = vector.extract_strided_slice %105 {offsets = [0, 0], sizes = [2, 96], strides = [1, 1]} : vector<2x128xf32> to vector<2x96xf32>
    %110 = arith.negf %109 : vector<2x96xf32>
    %111 = math.exp %110 : vector<2x96xf32>
    %cst_32 = arith.constant 1.000000e+00 : f32
    %112 = vector.broadcast %cst_32 : f32 to vector<2x96xf32>
    %113 = arith.addf %112, %111 : vector<2x96xf32>
    %114 = arith.divf %112, %113 : vector<2x96xf32>
    %115 = vector.extract_strided_slice %105 {offsets = [0, 96], sizes = [2, 32], strides = [1, 1]} : vector<2x128xf32> to vector<2x32xf32>
    %116 = math.tanh %115 : vector<2x32xf32>
    %117 = vector.extract_strided_slice %114 {offsets = [0, 0], sizes = [2, 32], strides = [1, 1]} : vector<2x96xf32> to vector<2x32xf32>
    %118 = vector.extract_strided_slice %114 {offsets = [0, 32], sizes = [2, 32], strides = [1, 1]} : vector<2x96xf32> to vector<2x32xf32>
    %119 = vector.extract_strided_slice %114 {offsets = [0, 64], sizes = [2, 32], strides = [1, 1]} : vector<2x96xf32> to vector<2x32xf32>
    %120 = arith.mulf %118, %76 : vector<2x32xf32>
    %121 = arith.mulf %117, %116 : vector<2x32xf32>
    %122 = arith.addf %120, %121 : vector<2x32xf32>
    %123 = math.tanh %122 : vector<2x32xf32>
    %124 = arith.mulf %119, %123 : vector<2x32xf32>
    %125 = vector.extract_strided_slice %108 {offsets = [0, 0], sizes = [2, 96], strides = [1, 1]} : vector<2x128xf32> to vector<2x96xf32>
    %126 = arith.negf %125 : vector<2x96xf32>
    %127 = math.exp %126 : vector<2x96xf32>
    %cst_33 = arith.constant 1.000000e+00 : f32
    %128 = vector.broadcast %cst_33 : f32 to vector<2x96xf32>
    %129 = arith.addf %128, %127 : vector<2x96xf32>
    %130 = arith.divf %128, %129 : vector<2x96xf32>
    %131 = vector.extract_strided_slice %108 {offsets = [0, 96], sizes = [2, 32], strides = [1, 1]} : vector<2x128xf32> to vector<2x32xf32>
    %132 = math.tanh %131 : vector<2x32xf32>
    %133 = vector.extract_strided_slice %130 {offsets = [0, 0], sizes = [2, 32], strides = [1, 1]} : vector<2x96xf32> to vector<2x32xf32>
    %134 = vector.extract_strided_slice %130 {offsets = [0, 32], sizes = [2, 32], strides = [1, 1]} : vector<2x96xf32> to vector<2x32xf32>
    %135 = vector.extract_strided_slice %130 {offsets = [0, 64], sizes = [2, 32], strides = [1, 1]} : vector<2x96xf32> to vector<2x32xf32>
    %136 = arith.mulf %134, %92 : vector<2x32xf32>
    %137 = arith.mulf %133, %132 : vector<2x32xf32>
    %138 = arith.addf %136, %137 : vector<2x32xf32>
    %139 = math.tanh %138 : vector<2x32xf32>
    %140 = arith.mulf %135, %139 : vector<2x32xf32>
    %c2_34 = arith.constant 2 : index
    %c0_35 = arith.constant 0 : index
    %c0_36 = arith.constant 0 : index
    %141 = vector.load %arg4[%c2_34, %c0_35, %c0_36] : memref<8x2x32xf32, #tpu.memory_space<vmem>>, vector<1x2x32xf32>
    %142 = vector.shape_cast %141 : vector<1x2x32xf32> to vector<2x32xf32>
    %143 = vector.shape_cast %124 : vector<2x32xf32> to vector<1x2x32xf32>
    tpu.vector_store %arg4[%c2_34, %c0_35, %c0_36], %143 {strides = array<i32>} : memref<8x2x32xf32, #tpu.memory_space<vmem>>, vector<1x2x32xf32>,
    %c5 = arith.constant 5 : index
    %c0_37 = arith.constant 0 : index
    %c0_38 = arith.constant 0 : index
    %144 = vector.load %arg5[%c5, %c0_37, %c0_38] : memref<8x2x32xf32, #tpu.memory_space<vmem>>, vector<1x2x32xf32>
    %145 = vector.shape_cast %144 : vector<1x2x32xf32> to vector<2x32xf32>
    %146 = vector.shape_cast %140 : vector<2x32xf32> to vector<1x2x32xf32>
    tpu.vector_store %arg5[%c5, %c0_37, %c0_38], %146 {strides = array<i32>} : memref<8x2x32xf32, #tpu.memory_space<vmem>>, vector<1x2x32xf32>,
    %147 = tpu.concatenate %124, %140 in 1 : vector<2x32xf32>, vector<2x32xf32> -> vector<2x64xf32>
    %cst_39 = arith.constant dense<0.000000e+00> : vector<2x256xf32>
    %148 = tpu.matmul %147, %7, %cst_39 {dimension_numbers = #tpu.dot_dimension_numbers<[1], [0], [0], [1], [0, 0, 1, 1], [], []>} : vector<2x64xf32>, vector<64x256xf32>, vector<2x256xf32> -> vector<2x256xf32>
    %c6_40 = arith.constant 6 : index
    %c0_41 = arith.constant 0 : index
    %149 = vector.load %arg6[%c6_40, %c0_41] : memref<16x256xf32, #tpu.memory_space<vmem>>, vector<2x128xf32>
    %150 = vector.extract_strided_slice %148 {offsets = [0, 0], sizes = [2, 128], strides = [1, 1]} : vector<2x256xf32> to vector<2x128xf32>
    %151 = arith.addf %149, %150 : vector<2x128xf32>
    %c8 = arith.constant 8 : index
    %c128_42 = arith.constant 128 : index
    %152 = vector.load %arg6[%c8, %c128_42] : memref<16x256xf32, #tpu.memory_space<vmem>>, vector<2x128xf32>
    %153 = vector.extract_strided_slice %148 {offsets = [0, 128], sizes = [2, 128], strides = [1, 1]} : vector<2x256xf32> to vector<2x128xf32>
    %154 = arith.addf %152, %153 : vector<2x128xf32>
    %155 = vector.extract_strided_slice %151 {offsets = [0, 0], sizes = [2, 96], strides = [1, 1]} : vector<2x128xf32> to vector<2x96xf32>
    %156 = arith.negf %155 : vector<2x96xf32>
    %157 = math.exp %156 : vector<2x96xf32>
    %cst_43 = arith.constant 1.000000e+00 : f32
    %158 = vector.broadcast %cst_43 : f32 to vector<2x96xf32>
    %159 = arith.addf %158, %157 : vector<2x96xf32>
    %160 = arith.divf %158, %159 : vector<2x96xf32>
    %161 = vector.extract_strided_slice %151 {offsets = [0, 96], sizes = [2, 32], strides = [1, 1]} : vector<2x128xf32> to vector<2x32xf32>
    %162 = math.tanh %161 : vector<2x32xf32>
    %163 = vector.extract_strided_slice %160 {offsets = [0, 0], sizes = [2, 32], strides = [1, 1]} : vector<2x96xf32> to vector<2x32xf32>
    %164 = vector.extract_strided_slice %160 {offsets = [0, 32], sizes = [2, 32], strides = [1, 1]} : vector<2x96xf32> to vector<2x32xf32>
    %165 = vector.extract_strided_slice %160 {offsets = [0, 64], sizes = [2, 32], strides = [1, 1]} : vector<2x96xf32> to vector<2x32xf32>
    %166 = arith.mulf %164, %122 : vector<2x32xf32>
    %167 = arith.mulf %163, %162 : vector<2x32xf32>
    %168 = arith.addf %166, %167 : vector<2x32xf32>
    %169 = math.tanh %168 : vector<2x32xf32>
    %170 = arith.mulf %165, %169 : vector<2x32xf32>
    %171 = vector.extract_strided_slice %154 {offsets = [0, 0], sizes = [2, 96], strides = [1, 1]} : vector<2x128xf32> to vector<2x96xf32>
    %172 = arith.negf %171 : vector<2x96xf32>
    %173 = math.exp %172 : vector<2x96xf32>
    %cst_44 = arith.constant 1.000000e+00 : f32
    %174 = vector.broadcast %cst_44 : f32 to vector<2x96xf32>
    %175 = arith.addf %174, %173 : vector<2x96xf32>
    %176 = arith.divf %174, %175 : vector<2x96xf32>
    %177 = vector.extract_strided_slice %154 {offsets = [0, 96], sizes = [2, 32], strides = [1, 1]} : vector<2x128xf32> to vector<2x32xf32>
    %178 = math.tanh %177 : vector<2x32xf32>
    %179 = vector.extract_strided_slice %176 {offsets = [0, 0], sizes = [2, 32], strides = [1, 1]} : vector<2x96xf32> to vector<2x32xf32>
    %180 = vector.extract_strided_slice %176 {offsets = [0, 32], sizes = [2, 32], strides = [1, 1]} : vector<2x96xf32> to vector<2x32xf32>
    %181 = vector.extract_strided_slice %176 {offsets = [0, 64], sizes = [2, 32], strides = [1, 1]} : vector<2x96xf32> to vector<2x32xf32>
    %182 = arith.mulf %180, %138 : vector<2x32xf32>
    %183 = arith.mulf %179, %178 : vector<2x32xf32>
    %184 = arith.addf %182, %183 : vector<2x32xf32>
    %185 = math.tanh %184 : vector<2x32xf32>
    %186 = arith.mulf %181, %185 : vector<2x32xf32>
    %c3 = arith.constant 3 : index
    %c0_45 = arith.constant 0 : index
    %c0_46 = arith.constant 0 : index
    %187 = vector.load %arg4[%c3, %c0_45, %c0_46] : memref<8x2x32xf32, #tpu.memory_space<vmem>>, vector<1x2x32xf32>
    %188 = vector.shape_cast %187 : vector<1x2x32xf32> to vector<2x32xf32>
    %189 = vector.shape_cast %170 : vector<2x32xf32> to vector<1x2x32xf32>
    tpu.vector_store %arg4[%c3, %c0_45, %c0_46], %189 {strides = array<i32>} : memref<8x2x32xf32, #tpu.memory_space<vmem>>, vector<1x2x32xf32>,
    %c4_47 = arith.constant 4 : index
    %c0_48 = arith.constant 0 : index
    %c0_49 = arith.constant 0 : index
    %190 = vector.load %arg5[%c4_47, %c0_48, %c0_49] : memref<8x2x32xf32, #tpu.memory_space<vmem>>, vector<1x2x32xf32>
    %191 = vector.shape_cast %190 : vector<1x2x32xf32> to vector<2x32xf32>
    %192 = vector.shape_cast %186 : vector<2x32xf32> to vector<1x2x32xf32>
    tpu.vector_store %arg5[%c4_47, %c0_48, %c0_49], %192 {strides = array<i32>} : memref<8x2x32xf32, #tpu.memory_space<vmem>>, vector<1x2x32xf32>,
    %193 = tpu.concatenate %170, %186 in 1 : vector<2x32xf32>, vector<2x32xf32> -> vector<2x64xf32>
    %cst_50 = arith.constant dense<0.000000e+00> : vector<2x256xf32>
    %194 = tpu.matmul %193, %7, %cst_50 {dimension_numbers = #tpu.dot_dimension_numbers<[1], [0], [0], [1], [0, 0, 1, 1], [], []>} : vector<2x64xf32>, vector<64x256xf32>, vector<2x256xf32> -> vector<2x256xf32>
    %c8_51 = arith.constant 8 : index
    %c0_52 = arith.constant 0 : index
    %195 = vector.load %arg6[%c8_51, %c0_52] : memref<16x256xf32, #tpu.memory_space<vmem>>, vector<2x128xf32>
    %196 = vector.extract_strided_slice %194 {offsets = [0, 0], sizes = [2, 128], strides = [1, 1]} : vector<2x256xf32> to vector<2x128xf32>
    %197 = arith.addf %195, %196 : vector<2x128xf32>
    %c6_53 = arith.constant 6 : index
    %c128_54 = arith.constant 128 : index
    %198 = vector.load %arg6[%c6_53, %c128_54] : memref<16x256xf32, #tpu.memory_space<vmem>>, vector<2x128xf32>
    %199 = vector.extract_strided_slice %194 {offsets = [0, 128], sizes = [2, 128], strides = [1, 1]} : vector<2x256xf32> to vector<2x128xf32>
    %200 = arith.addf %198, %199 : vector<2x128xf32>
    %201 = vector.extract_strided_slice %197 {offsets = [0, 0], sizes = [2, 96], strides = [1, 1]} : vector<2x128xf32> to vector<2x96xf32>
    %202 = arith.negf %201 : vector<2x96xf32>
    %203 = math.exp %202 : vector<2x96xf32>
    %cst_55 = arith.constant 1.000000e+00 : f32
    %204 = vector.broadcast %cst_55 : f32 to vector<2x96xf32>
    %205 = arith.addf %204, %203 : vector<2x96xf32>
    %206 = arith.divf %204, %205 : vector<2x96xf32>
    %207 = vector.extract_strided_slice %197 {offsets = [0, 96], sizes = [2, 32], strides = [1, 1]} : vector<2x128xf32> to vector<2x32xf32>
    %208 = math.tanh %207 : vector<2x32xf32>
    %209 = vector.extract_strided_slice %206 {offsets = [0, 0], sizes = [2, 32], strides = [1, 1]} : vector<2x96xf32> to vector<2x32xf32>
    %210 = vector.extract_strided_slice %206 {offsets = [0, 32], sizes = [2, 32], strides = [1, 1]} : vector<2x96xf32> to vector<2x32xf32>
    %211 = vector.extract_strided_slice %206 {offsets = [0, 64], sizes = [2, 32], strides = [1, 1]} : vector<2x96xf32> to vector<2x32xf32>
    %212 = arith.mulf %210, %168 : vector<2x32xf32>
    %213 = arith.mulf %209, %208 : vector<2x32xf32>
    %214 = arith.addf %212, %213 : vector<2x32xf32>
    %215 = math.tanh %214 : vector<2x32xf32>
    %216 = arith.mulf %211, %215 : vector<2x32xf32>
    %217 = vector.extract_strided_slice %200 {offsets = [0, 0], sizes = [2, 96], strides = [1, 1]} : vector<2x128xf32> to vector<2x96xf32>
    %218 = arith.negf %217 : vector<2x96xf32>
    %219 = math.exp %218 : vector<2x96xf32>
    %cst_56 = arith.constant 1.000000e+00 : f32
    %220 = vector.broadcast %cst_56 : f32 to vector<2x96xf32>
    %221 = arith.addf %220, %219 : vector<2x96xf32>
    %222 = arith.divf %220, %221 : vector<2x96xf32>
    %223 = vector.extract_strided_slice %200 {offsets = [0, 96], sizes = [2, 32], strides = [1, 1]} : vector<2x128xf32> to vector<2x32xf32>
    %224 = math.tanh %223 : vector<2x32xf32>
    %225 = vector.extract_strided_slice %222 {offsets = [0, 0], sizes = [2, 32], strides = [1, 1]} : vector<2x96xf32> to vector<2x32xf32>
    %226 = vector.extract_strided_slice %222 {offsets = [0, 32], sizes = [2, 32], strides = [1, 1]} : vector<2x96xf32> to vector<2x32xf32>
    %227 = vector.extract_strided_slice %222 {offsets = [0, 64], sizes = [2, 32], strides = [1, 1]} : vector<2x96xf32> to vector<2x32xf32>
    %228 = arith.mulf %226, %184 : vector<2x32xf32>
    %229 = arith.mulf %225, %224 : vector<2x32xf32>
    %230 = arith.addf %228, %229 : vector<2x32xf32>
    %231 = math.tanh %230 : vector<2x32xf32>
    %232 = arith.mulf %227, %231 : vector<2x32xf32>
    %c4_57 = arith.constant 4 : index
    %c0_58 = arith.constant 0 : index
    %c0_59 = arith.constant 0 : index
    %233 = vector.load %arg4[%c4_57, %c0_58, %c0_59] : memref<8x2x32xf32, #tpu.memory_space<vmem>>, vector<1x2x32xf32>
    %234 = vector.shape_cast %233 : vector<1x2x32xf32> to vector<2x32xf32>
    %235 = vector.shape_cast %216 : vector<2x32xf32> to vector<1x2x32xf32>
    tpu.vector_store %arg4[%c4_57, %c0_58, %c0_59], %235 {strides = array<i32>} : memref<8x2x32xf32, #tpu.memory_space<vmem>>, vector<1x2x32xf32>,
    %c3_60 = arith.constant 3 : index
    %c0_61 = arith.constant 0 : index
    %c0_62 = arith.constant 0 : index
    %236 = vector.load %arg5[%c3_60, %c0_61, %c0_62] : memref<8x2x32xf32, #tpu.memory_space<vmem>>, vector<1x2x32xf32>
    %237 = vector.shape_cast %236 : vector<1x2x32xf32> to vector<2x32xf32>
    %238 = vector.shape_cast %232 : vector<2x32xf32> to vector<1x2x32xf32>
    tpu.vector_store %arg5[%c3_60, %c0_61, %c0_62], %238 {strides = array<i32>} : memref<8x2x32xf32, #tpu.memory_space<vmem>>, vector<1x2x32xf32>,
    %239 = tpu.concatenate %216, %232 in 1 : vector<2x32xf32>, vector<2x32xf32> -> vector<2x64xf32>
    %cst_63 = arith.constant dense<0.000000e+00> : vector<2x256xf32>
    %240 = tpu.matmul %239, %7, %cst_63 {dimension_numbers = #tpu.dot_dimension_numbers<[1], [0], [0], [1], [0, 0, 1, 1], [], []>} : vector<2x64xf32>, vector<64x256xf32>, vector<2x256xf32> -> vector<2x256xf32>
    %c10_64 = arith.constant 10 : index
    %c0_65 = arith.constant 0 : index
    %241 = vector.load %arg6[%c10_64, %c0_65] : memref<16x256xf32, #tpu.memory_space<vmem>>, vector<2x128xf32>
    %242 = vector.extract_strided_slice %240 {offsets = [0, 0], sizes = [2, 128], strides = [1, 1]} : vector<2x256xf32> to vector<2x128xf32>
    %243 = arith.addf %241, %242 : vector<2x128xf32>
    %c4_66 = arith.constant 4 : index
    %c128_67 = arith.constant 128 : index
    %244 = vector.load %arg6[%c4_66, %c128_67] : memref<16x256xf32, #tpu.memory_space<vmem>>, vector<2x128xf32>
    %245 = vector.extract_strided_slice %240 {offsets = [0, 128], sizes = [2, 128], strides = [1, 1]} : vector<2x256xf32> to vector<2x128xf32>
    %246 = arith.addf %244, %245 : vector<2x128xf32>
    %247 = vector.extract_strided_slice %243 {offsets = [0, 0], sizes = [2, 96], strides = [1, 1]} : vector<2x128xf32> to vector<2x96xf32>
    %248 = arith.negf %247 : vector<2x96xf32>
    %249 = math.exp %248 : vector<2x96xf32>
    %cst_68 = arith.constant 1.000000e+00 : f32
    %250 = vector.broadcast %cst_68 : f32 to vector<2x96xf32>
    %251 = arith.addf %250, %249 : vector<2x96xf32>
    %252 = arith.divf %250, %251 : vector<2x96xf32>
    %253 = vector.extract_strided_slice %243 {offsets = [0, 96], sizes = [2, 32], strides = [1, 1]} : vector<2x128xf32> to vector<2x32xf32>
    %254 = math.tanh %253 : vector<2x32xf32>
    %255 = vector.extract_strided_slice %252 {offsets = [0, 0], sizes = [2, 32], strides = [1, 1]} : vector<2x96xf32> to vector<2x32xf32>
    %256 = vector.extract_strided_slice %252 {offsets = [0, 32], sizes = [2, 32], strides = [1, 1]} : vector<2x96xf32> to vector<2x32xf32>
    %257 = vector.extract_strided_slice %252 {offsets = [0, 64], sizes = [2, 32], strides = [1, 1]} : vector<2x96xf32> to vector<2x32xf32>
    %258 = arith.mulf %256, %214 : vector<2x32xf32>
    %259 = arith.mulf %255, %254 : vector<2x32xf32>
    %260 = arith.addf %258, %259 : vector<2x32xf32>
    %261 = math.tanh %260 : vector<2x32xf32>
    %262 = arith.mulf %257, %261 : vector<2x32xf32>
    %263 = vector.extract_strided_slice %246 {offsets = [0, 0], sizes = [2, 96], strides = [1, 1]} : vector<2x128xf32> to vector<2x96xf32>
    %264 = arith.negf %263 : vector<2x96xf32>
    %265 = math.exp %264 : vector<2x96xf32>
    %cst_69 = arith.constant 1.000000e+00 : f32
    %266 = vector.broadcast %cst_69 : f32 to vector<2x96xf32>
    %267 = arith.addf %266, %265 : vector<2x96xf32>
    %268 = arith.divf %266, %267 : vector<2x96xf32>
    %269 = vector.extract_strided_slice %246 {offsets = [0, 96], sizes = [2, 32], strides = [1, 1]} : vector<2x128xf32> to vector<2x32xf32>
    %270 = math.tanh %269 : vector<2x32xf32>
    %271 = vector.extract_strided_slice %268 {offsets = [0, 0], sizes = [2, 32], strides = [1, 1]} : vector<2x96xf32> to vector<2x32xf32>
    %272 = vector.extract_strided_slice %268 {offsets = [0, 32], sizes = [2, 32], strides = [1, 1]} : vector<2x96xf32> to vector<2x32xf32>
    %273 = vector.extract_strided_slice %268 {offsets = [0, 64], sizes = [2, 32], strides = [1, 1]} : vector<2x96xf32> to vector<2x32xf32>
    %274 = arith.mulf %272, %230 : vector<2x32xf32>
    %275 = arith.mulf %271, %270 : vector<2x32xf32>
    %276 = arith.addf %274, %275 : vector<2x32xf32>
    %277 = math.tanh %276 : vector<2x32xf32>
    %278 = arith.mulf %273, %277 : vector<2x32xf32>
    %c5_70 = arith.constant 5 : index
    %c0_71 = arith.constant 0 : index
    %c0_72 = arith.constant 0 : index
    %279 = vector.load %arg4[%c5_70, %c0_71, %c0_72] : memref<8x2x32xf32, #tpu.memory_space<vmem>>, vector<1x2x32xf32>
    %280 = vector.shape_cast %279 : vector<1x2x32xf32> to vector<2x32xf32>
    %281 = vector.shape_cast %262 : vector<2x32xf32> to vector<1x2x32xf32>
    tpu.vector_store %arg4[%c5_70, %c0_71, %c0_72], %281 {strides = array<i32>} : memref<8x2x32xf32, #tpu.memory_space<vmem>>, vector<1x2x32xf32>,
    %c2_73 = arith.constant 2 : index
    %c0_74 = arith.constant 0 : index
    %c0_75 = arith.constant 0 : index
    %282 = vector.load %arg5[%c2_73, %c0_74, %c0_75] : memref<8x2x32xf32, #tpu.memory_space<vmem>>, vector<1x2x32xf32>
    %283 = vector.shape_cast %282 : vector<1x2x32xf32> to vector<2x32xf32>
    %284 = vector.shape_cast %278 : vector<2x32xf32> to vector<1x2x32xf32>
    tpu.vector_store %arg5[%c2_73, %c0_74, %c0_75], %284 {strides = array<i32>} : memref<8x2x32xf32, #tpu.memory_space<vmem>>, vector<1x2x32xf32>,
    %285 = tpu.concatenate %262, %278 in 1 : vector<2x32xf32>, vector<2x32xf32> -> vector<2x64xf32>
    %cst_76 = arith.constant dense<0.000000e+00> : vector<2x256xf32>
    %286 = tpu.matmul %285, %7, %cst_76 {dimension_numbers = #tpu.dot_dimension_numbers<[1], [0], [0], [1], [0, 0, 1, 1], [], []>} : vector<2x64xf32>, vector<64x256xf32>, vector<2x256xf32> -> vector<2x256xf32>
    %c12_77 = arith.constant 12 : index
    %c0_78 = arith.constant 0 : index
    %287 = vector.load %arg6[%c12_77, %c0_78] : memref<16x256xf32, #tpu.memory_space<vmem>>, vector<2x128xf32>
    %288 = vector.extract_strided_slice %286 {offsets = [0, 0], sizes = [2, 128], strides = [1, 1]} : vector<2x256xf32> to vector<2x128xf32>
    %289 = arith.addf %287, %288 : vector<2x128xf32>
    %c2_79 = arith.constant 2 : index
    %c128_80 = arith.constant 128 : index
    %290 = vector.load %arg6[%c2_79, %c128_80] : memref<16x256xf32, #tpu.memory_space<vmem>>, vector<2x128xf32>
    %291 = vector.extract_strided_slice %286 {offsets = [0, 128], sizes = [2, 128], strides = [1, 1]} : vector<2x256xf32> to vector<2x128xf32>
    %292 = arith.addf %290, %291 : vector<2x128xf32>
    %293 = vector.extract_strided_slice %289 {offsets = [0, 0], sizes = [2, 96], strides = [1, 1]} : vector<2x128xf32> to vector<2x96xf32>
    %294 = arith.negf %293 : vector<2x96xf32>
    %295 = math.exp %294 : vector<2x96xf32>
    %cst_81 = arith.constant 1.000000e+00 : f32
    %296 = vector.broadcast %cst_81 : f32 to vector<2x96xf32>
    %297 = arith.addf %296, %295 : vector<2x96xf32>
    %298 = arith.divf %296, %297 : vector<2x96xf32>
    %299 = vector.extract_strided_slice %289 {offsets = [0, 96], sizes = [2, 32], strides = [1, 1]} : vector<2x128xf32> to vector<2x32xf32>
    %300 = math.tanh %299 : vector<2x32xf32>
    %301 = vector.extract_strided_slice %298 {offsets = [0, 0], sizes = [2, 32], strides = [1, 1]} : vector<2x96xf32> to vector<2x32xf32>
    %302 = vector.extract_strided_slice %298 {offsets = [0, 32], sizes = [2, 32], strides = [1, 1]} : vector<2x96xf32> to vector<2x32xf32>
    %303 = vector.extract_strided_slice %298 {offsets = [0, 64], sizes = [2, 32], strides = [1, 1]} : vector<2x96xf32> to vector<2x32xf32>
    %304 = arith.mulf %302, %260 : vector<2x32xf32>
    %305 = arith.mulf %301, %300 : vector<2x32xf32>
    %306 = arith.addf %304, %305 : vector<2x32xf32>
    %307 = math.tanh %306 : vector<2x32xf32>
    %308 = arith.mulf %303, %307 : vector<2x32xf32>
    %309 = vector.extract_strided_slice %292 {offsets = [0, 0], sizes = [2, 96], strides = [1, 1]} : vector<2x128xf32> to vector<2x96xf32>
    %310 = arith.negf %309 : vector<2x96xf32>
    %311 = math.exp %310 : vector<2x96xf32>
    %cst_82 = arith.constant 1.000000e+00 : f32
    %312 = vector.broadcast %cst_82 : f32 to vector<2x96xf32>
    %313 = arith.addf %312, %311 : vector<2x96xf32>
    %314 = arith.divf %312, %313 : vector<2x96xf32>
    %315 = vector.extract_strided_slice %292 {offsets = [0, 96], sizes = [2, 32], strides = [1, 1]} : vector<2x128xf32> to vector<2x32xf32>
    %316 = math.tanh %315 : vector<2x32xf32>
    %317 = vector.extract_strided_slice %314 {offsets = [0, 0], sizes = [2, 32], strides = [1, 1]} : vector<2x96xf32> to vector<2x32xf32>
    %318 = vector.extract_strided_slice %314 {offsets = [0, 32], sizes = [2, 32], strides = [1, 1]} : vector<2x96xf32> to vector<2x32xf32>
    %319 = vector.extract_strided_slice %314 {offsets = [0, 64], sizes = [2, 32], strides = [1, 1]} : vector<2x96xf32> to vector<2x32xf32>
    %320 = arith.mulf %318, %276 : vector<2x32xf32>
    %321 = arith.mulf %317, %316 : vector<2x32xf32>
    %322 = arith.addf %320, %321 : vector<2x32xf32>
    %323 = math.tanh %322 : vector<2x32xf32>
    %324 = arith.mulf %319, %323 : vector<2x32xf32>
    %c6_83 = arith.constant 6 : index
    %c0_84 = arith.constant 0 : index
    %c0_85 = arith.constant 0 : index
    %325 = vector.load %arg4[%c6_83, %c0_84, %c0_85] : memref<8x2x32xf32, #tpu.memory_space<vmem>>, vector<1x2x32xf32>
    %326 = vector.shape_cast %325 : vector<1x2x32xf32> to vector<2x32xf32>
    %327 = vector.shape_cast %308 : vector<2x32xf32> to vector<1x2x32xf32>
    tpu.vector_store %arg4[%c6_83, %c0_84, %c0_85], %327 {strides = array<i32>} : memref<8x2x32xf32, #tpu.memory_space<vmem>>, vector<1x2x32xf32>,
    %c1_86 = arith.constant 1 : index
    %c0_87 = arith.constant 0 : index
    %c0_88 = arith.constant 0 : index
    %328 = vector.load %arg5[%c1_86, %c0_87, %c0_88] : memref<8x2x32xf32, #tpu.memory_space<vmem>>, vector<1x2x32xf32>
    %329 = vector.shape_cast %328 : vector<1x2x32xf32> to vector<2x32xf32>
    %330 = vector.shape_cast %324 : vector<2x32xf32> to vector<1x2x32xf32>
    tpu.vector_store %arg5[%c1_86, %c0_87, %c0_88], %330 {strides = array<i32>} : memref<8x2x32xf32, #tpu.memory_space<vmem>>, vector<1x2x32xf32>,
    %331 = tpu.concatenate %308, %324 in 1 : vector<2x32xf32>, vector<2x32xf32> -> vector<2x64xf32>
    %cst_89 = arith.constant dense<0.000000e+00> : vector<2x256xf32>
    %332 = tpu.matmul %331, %7, %cst_89 {dimension_numbers = #tpu.dot_dimension_numbers<[1], [0], [0], [1], [0, 0, 1, 1], [], []>} : vector<2x64xf32>, vector<64x256xf32>, vector<2x256xf32> -> vector<2x256xf32>
    %c14_90 = arith.constant 14 : index
    %c0_91 = arith.constant 0 : index
    %333 = vector.load %arg6[%c14_90, %c0_91] : memref<16x256xf32, #tpu.memory_space<vmem>>, vector<2x128xf32>
    %334 = vector.extract_strided_slice %332 {offsets = [0, 0], sizes = [2, 128], strides = [1, 1]} : vector<2x256xf32> to vector<2x128xf32>
    %335 = arith.addf %333, %334 : vector<2x128xf32>
    %c0_92 = arith.constant 0 : index
    %c128_93 = arith.constant 128 : index
    %336 = vector.load %arg6[%c0_92, %c128_93] : memref<16x256xf32, #tpu.memory_space<vmem>>, vector<2x128xf32>
    %337 = vector.extract_strided_slice %332 {offsets = [0, 128], sizes = [2, 128], strides = [1, 1]} : vector<2x256xf32> to vector<2x128xf32>
    %338 = arith.addf %336, %337 : vector<2x128xf32>
    %339 = vector.extract_strided_slice %335 {offsets = [0, 0], sizes = [2, 96], strides = [1, 1]} : vector<2x128xf32> to vector<2x96xf32>
    %340 = arith.negf %339 : vector<2x96xf32>
    %341 = math.exp %340 : vector<2x96xf32>
    %cst_94 = arith.constant 1.000000e+00 : f32
    %342 = vector.broadcast %cst_94 : f32 to vector<2x96xf32>
    %343 = arith.addf %342, %341 : vector<2x96xf32>
    %344 = arith.divf %342, %343 : vector<2x96xf32>
    %345 = vector.extract_strided_slice %335 {offsets = [0, 96], sizes = [2, 32], strides = [1, 1]} : vector<2x128xf32> to vector<2x32xf32>
    %346 = math.tanh %345 : vector<2x32xf32>
    %347 = vector.extract_strided_slice %344 {offsets = [0, 0], sizes = [2, 32], strides = [1, 1]} : vector<2x96xf32> to vector<2x32xf32>
    %348 = vector.extract_strided_slice %344 {offsets = [0, 32], sizes = [2, 32], strides = [1, 1]} : vector<2x96xf32> to vector<2x32xf32>
    %349 = vector.extract_strided_slice %344 {offsets = [0, 64], sizes = [2, 32], strides = [1, 1]} : vector<2x96xf32> to vector<2x32xf32>
    %350 = arith.mulf %348, %306 : vector<2x32xf32>
    %351 = arith.mulf %347, %346 : vector<2x32xf32>
    %352 = arith.addf %350, %351 : vector<2x32xf32>
    %353 = math.tanh %352 : vector<2x32xf32>
    %354 = arith.mulf %349, %353 : vector<2x32xf32>
    %355 = vector.extract_strided_slice %338 {offsets = [0, 0], sizes = [2, 96], strides = [1, 1]} : vector<2x128xf32> to vector<2x96xf32>
    %356 = arith.negf %355 : vector<2x96xf32>
    %357 = math.exp %356 : vector<2x96xf32>
    %cst_95 = arith.constant 1.000000e+00 : f32
    %358 = vector.broadcast %cst_95 : f32 to vector<2x96xf32>
    %359 = arith.addf %358, %357 : vector<2x96xf32>
    %360 = arith.divf %358, %359 : vector<2x96xf32>
    %361 = vector.extract_strided_slice %338 {offsets = [0, 96], sizes = [2, 32], strides = [1, 1]} : vector<2x128xf32> to vector<2x32xf32>
    %362 = math.tanh %361 : vector<2x32xf32>
    %363 = vector.extract_strided_slice %360 {offsets = [0, 0], sizes = [2, 32], strides = [1, 1]} : vector<2x96xf32> to vector<2x32xf32>
    %364 = vector.extract_strided_slice %360 {offsets = [0, 32], sizes = [2, 32], strides = [1, 1]} : vector<2x96xf32> to vector<2x32xf32>
    %365 = vector.extract_strided_slice %360 {offsets = [0, 64], sizes = [2, 32], strides = [1, 1]} : vector<2x96xf32> to vector<2x32xf32>
    %366 = arith.mulf %364, %322 : vector<2x32xf32>
    %367 = arith.mulf %363, %362 : vector<2x32xf32>
    %368 = arith.addf %366, %367 : vector<2x32xf32>
    %369 = math.tanh %368 : vector<2x32xf32>
    %370 = arith.mulf %365, %369 : vector<2x32xf32>
    %c7_96 = arith.constant 7 : index
    %c0_97 = arith.constant 0 : index
    %c0_98 = arith.constant 0 : index
    %371 = vector.load %arg4[%c7_96, %c0_97, %c0_98] : memref<8x2x32xf32, #tpu.memory_space<vmem>>, vector<1x2x32xf32>
    %372 = vector.shape_cast %371 : vector<1x2x32xf32> to vector<2x32xf32>
    %373 = vector.shape_cast %354 : vector<2x32xf32> to vector<1x2x32xf32>
    tpu.vector_store %arg4[%c7_96, %c0_97, %c0_98], %373 {strides = array<i32>} : memref<8x2x32xf32, #tpu.memory_space<vmem>>, vector<1x2x32xf32>,
    %c0_99 = arith.constant 0 : index
    %c0_100 = arith.constant 0 : index
    %c0_101 = arith.constant 0 : index
    %374 = vector.load %arg5[%c0_99, %c0_100, %c0_101] : memref<8x2x32xf32, #tpu.memory_space<vmem>>, vector<1x2x32xf32>
    %375 = vector.shape_cast %374 : vector<1x2x32xf32> to vector<2x32xf32>
    %376 = vector.shape_cast %370 : vector<2x32xf32> to vector<1x2x32xf32>
    tpu.vector_store %arg5[%c0_99, %c0_100, %c0_101], %376 {strides = array<i32>} : memref<8x2x32xf32, #tpu.memory_space<vmem>>, vector<1x2x32xf32>,
    return
  }
}

</mosaic_0001>

<llo_original>
// kernel: tpu_custom_call.1
$region0: #{tpu_custom_call.1}
  #allocation0 [shape = 'u32[]', space=smem, size = 0x4, offset = 0x4, fixed_abs, tag = 'smem constant byte address 0x4 - core index']
  #allocation1 [shape = 'u32[72,128]{1,0:T(1,128)}', space=vmem, size = 0x9000, scoped, tag = 'internal scratch']
  #allocation2 [shape = 'f32[16,256]{1,0:T(8,128)}', space=vmem, size = 0x4000, scoped, tag = 'scratch operand']
  %s0 = inlined_call_operand.hbm [shape: f32[16,16], index: 0, kind: input, shape index: {}]
  %s1 = inlined_call_operand.hbm [shape: f32[16,256], index: 1, kind: input, shape index: {}]
  %s2 = inlined_call_operand.hbm [shape: f32[64,256], index: 2, kind: input, shape index: {}]
  %s3 = inlined_call_operand.vmem [shape: f32[1,256], index: 3, kind: input, shape index: {}]
  %s4 = inlined_call_operand.hbm [shape: f32[8,2,32], index: 4, kind: output, shape index: {0}]
  %s5 = inlined_call_operand.hbm [shape: f32[8,2,32], index: 5, kind: output, shape index: {1}]
  %6 = xla_tuple %s4, %s5
  %s7 = sld [smem:[#allocation0]]
  $region46: #{tpu_custom_call.1} parent=0
    _
  %s9 = ssub.s32 1, %s7
  %s10 = scalar_select 0, %s9, %s7
  $region1: #{tpu_custom_call.1} parent=0
    #allocation3 [shape = 'u8[8192]{0}', space=vmem, size = 0x2000, scoped, tag = 'input window, operand 0, single buffered']
    #allocation4 [shape = 's32[1]{0}', space=sflag, size = 0x4, scoped, tag = 'scoped memory for tpu_custom_call.1']
    #allocation5 [shape = 's32[1]{0}', space=sflag, size = 0x4, scoped, tag = 'scoped memory for tpu_custom_call.1']
    #allocation6 [shape = 'u8[16384]{0}', space=vmem, size = 0x4000, scoped, tag = 'input window, operand 1, single buffered']
    #allocation7 [shape = 's32[1]{0}', space=sflag, size = 0x4, scoped, tag = 'scoped memory for tpu_custom_call.1']
    #allocation8 [shape = 'u8[65536]{0}', space=vmem, size = 0x10000, scoped, tag = 'input window, operand 2, single buffered']
    #allocation9 [shape = 'u8[8192]{0}', space=vmem, size = 0x2000, scoped, tag = 'output window, operand 0, single buffered']
    #allocation10 [shape = 'u8[8192]{0}', space=vmem, size = 0x2000, scoped, tag = 'output window, operand 1, single buffered']
    #allocation11 [shape = 's32[1]{0}', space=sflag, size = 0x4, scoped, tag = 'scoped memory for tpu_custom_call.1']
    %11 = vsyncpa [#allocation4], 0
    %12 = vsyncpa [#allocation7], 0
    %13 = vsyncpa [#allocation5], 0
    %14 = vsyncpa [#allocation11], 0
    // Predicated region
    $region2: #{tpu_custom_call.1} parent=1 // pred_check
      _
    $region3: #{tpu_custom_call.1} parent=1 // pred_check_branch
      %16 = sbr.rel (0) target = $region5
    $region4: #{tpu_custom_call.1} parent=1 // pred_region
      %18 = vsyncadd [#allocation4], 0
      %s19 = sshll.u32 %s0, 4
      %s20 = int_to_ptr.hbm [resolvable:$true] %s19
      %s21 = sshll.u32 [#allocation3], 4
      %s22 = int_to_ptr.vmem [resolvable:$true] %s21
      %27 = dma.hbm_to_vmem [thread:$0]  %s20, 256, %s22, [#allocation4], 128, 128, 8
    $region5: #{tpu_custom_call.1} parent=1 // pred_fallthru
      _
    // Predicated region
    $region6: #{tpu_custom_call.1} parent=1 // pred_check
      _
    $region7: #{tpu_custom_call.1} parent=1 // pred_check_branch
      %29 = sbr.rel (0) target = $region9
    $region8: #{tpu_custom_call.1} parent=1 // pred_region
      %31 = vsyncadd [#allocation7], 0
      %s32 = sshll.u32 %s1, 4
      %s33 = int_to_ptr.hbm [resolvable:$true] %s32
      %s34 = sshll.u32 [#allocation6], 4
      %s35 = int_to_ptr.vmem [resolvable:$true] %s34
      %40 = dma.hbm_to_vmem [thread:$0]  %s33, 512, %s35, [#allocation7], 256, 256, 16
    $region9: #{tpu_custom_call.1} parent=1 // pred_fallthru
      _
    // Predicated region
    $region10: #{tpu_custom_call.1} parent=1 // pred_check
      _
    $region11: #{tpu_custom_call.1} parent=1 // pred_check_branch
      %42 = sbr.rel (0) target = $region13
    $region12: #{tpu_custom_call.1} parent=1 // pred_region
      %44 = vsyncadd [#allocation7], 0
      %s45 = sshll.u32 %s2, 4
      %s46 = int_to_ptr.hbm [resolvable:$true] %s45
      %s47 = sshll.u32 [#allocation8], 4
      %s48 = int_to_ptr.vmem [resolvable:$true] %s47
      %53 = dma.hbm_to_vmem [thread:$0]  %s46, 2048, %s48, [#allocation7], 256, 256, 16
    $region13: #{tpu_custom_call.1} parent=1 // pred_fallthru
      _
    // Predicated region
    $region14: #{tpu_custom_call.1} parent=1 // pred_check
      _
    $region15: #{tpu_custom_call.1} parent=1 // pred_check_branch
      %55 = sbr.rel (0) target = $region17
    $region16: #{tpu_custom_call.1} parent=1 // pred_region
      _
    $region17: #{tpu_custom_call.1} parent=1 // pred_fallthru
      _
    // Predicated region
    $region18: #{tpu_custom_call.1} parent=1 // pred_check
      _
    $region19: #{tpu_custom_call.1} parent=1 // pred_check_branch
      %57 = sbr.rel (0) target = $region21
    $region20: #{tpu_custom_call.1} parent=1 // pred_region
      %59 = dma.done [#allocation4], 256
    $region21: #{tpu_custom_call.1} parent=1 // pred_fallthru
      _
    // Predicated region
    $region22: #{tpu_custom_call.1} parent=1 // pred_check
      _
    $region23: #{tpu_custom_call.1} parent=1 // pred_check_branch
      %61 = sbr.rel (0) target = $region25
    $region24: #{tpu_custom_call.1} parent=1 // pred_region
      %63 = dma.done [#allocation7], 512
    $region25: #{tpu_custom_call.1} parent=1 // pred_fallthru
      _
    // Predicated region
    $region26: #{tpu_custom_call.1} parent=1 // pred_check
      _
    $region27: #{tpu_custom_call.1} parent=1 // pred_check_branch
      %65 = sbr.rel (0) target = $region29
    $region28: #{tpu_custom_call.1} parent=1 // pred_region
      %67 = dma.done [#allocation7], 2048
    $region29: #{tpu_custom_call.1} parent=1 // pred_fallthru
      _
    %v68 = vld [vmem:[#allocation3] sm:$0xff]
    %v69 = vld [vmem:[#allocation3 + $0x8] sm:$0xff]
    %v70 = vld [vmem:[#allocation6] sm:$0xff]
    %v71 = vld [vmem:[#allocation6 + $0x8] sm:$0xff]
    %v72 = vld [vmem:[#allocation6 + $0x10] sm:$0xff]
    %v73 = vld [vmem:[#allocation6 + $0x18] sm:$0xff]
    %v74 = vld [vmem:[%s3] sm:$0x3]
    %v76 = vperm.slane %v74, 0
    %v77 = vperm.slane %v74, 1
    %vm80 = vcmask 130048
    %v82 = vsel %vm80, %v68, 0
    %v85 = vsel %vm80, %v69, 0
    %87 = vmatpush.msra.mxu0 0.0
    %88 = vmatpush.msra.mxu0 0.0
    %89 = vmatpush.msra.mxu0 0.0
    %90 = vmatpush.msra.mxu0 0.0
    %91 = vmatpush.msra.mxu0 0.0
    %92 = vmatpush.msra.mxu0 0.0
    %93 = vmatpush.msra.mxu0 0.0
    %94 = vmatpush.msra.mxu0 0.0
    %95 = vmatpush.msra.mxu0 0.0
    %96 = vmatpush.msra.mxu0 0.0
    %97 = vmatpush.msra.mxu0 0.0
    %98 = vmatpush.msra.mxu0 0.0
    %99 = vmatpush.msra.mxu0 0.0
    %100 = vmatpush.msra.mxu0 0.0
    %101 = vmatpush.msra.mxu0 %v72
    %102 = vmatpush.msra.mxu0 %v70
    %103 = vmatmul.f32.gmra.mxu0 %v82
    %v104 = vpop.f32.mrf.mxu0
    %v105 = vadd.f32 %v76, %v104
    %106 = vmatmul.f32.gmra.mxu0 %v85
    %v107 = vpop.f32.mrf.mxu0
    %v108 = vadd.f32 %v76, %v107
    %109 = vdwg.mxu0
    %110 = vmatpush.msra.mxu0 0.0
    %111 = vmatpush.msra.mxu0 0.0
    %112 = vmatpush.msra.mxu0 0.0
    %113 = vmatpush.msra.mxu0 0.0
    %114 = vmatpush.msra.mxu0 0.0
    %115 = vmatpush.msra.mxu0 0.0
    %116 = vmatpush.msra.mxu0 0.0
    %117 = vmatpush.msra.mxu0 0.0
    %118 = vmatpush.msra.mxu0 0.0
    %119 = vmatpush.msra.mxu0 0.0
    %120 = vmatpush.msra.mxu0 0.0
    %121 = vmatpush.msra.mxu0 0.0
    %122 = vmatpush.msra.mxu0 0.0
    %123 = vmatpush.msra.mxu0 0.0
    %124 = vmatpush.msra.mxu0 %v73
    %125 = vmatpush.msra.mxu0 %v71
    %126 = vmatmul.f32.gmra.mxu0 %v82
    %v127 = vpop.f32.mrf.mxu0
    %v128 = vadd.f32 %v77, %v127
    %129 = vmatmul.f32.gmra.mxu0 %v85
    %v130 = vpop.f32.mrf.mxu0
    %v131 = vadd.f32 %v77, %v130
    %132 = vdwg.mxu0
    %133 = vst [vmem:[#allocation2] sm:$0xff] %v105
    %134 = vst [vmem:[#allocation2 + $0x8] sm:$0xff] %v128
    %135 = vst [vmem:[#allocation2 + $0x10] sm:$0xff] %v108
    %136 = vst [vmem:[#allocation2 + $0x18] sm:$0xff] %v131
    %v137 = vld [vmem:[#allocation8] sm:$0xff]
    %v138 = vld [vmem:[#allocation8 + $0x8] sm:$0xff]
    %v139 = vld [vmem:[#allocation8 + $0x10] sm:$0xff]
    %v140 = vld [vmem:[#allocation8 + $0x18] sm:$0xff]
    %v141 = vld [vmem:[#allocation8 + $0x20] sm:$0xff]
    %v142 = vld [vmem:[#allocation8 + $0x28] sm:$0xff]
    %v143 = vld [vmem:[#allocation8 + $0x30] sm:$0xff]
    %v144 = vld [vmem:[#allocation8 + $0x38] sm:$0xff]
    %v145 = vld [vmem:[#allocation8 + $0x40] sm:$0xff]
    %v146 = vld [vmem:[#allocation8 + $0x48] sm:$0xff]
    %v147 = vld [vmem:[#allocation8 + $0x50] sm:$0xff]
    %v148 = vld [vmem:[#allocation8 + $0x58] sm:$0xff]
    %v149 = vld [vmem:[#allocation8 + $0x60] sm:$0xff]
    %v150 = vld [vmem:[#allocation8 + $0x68] sm:$0xff]
    %v151 = vld [vmem:[#allocation8 + $0x70] sm:$0xff]
    %v152 = vld [vmem:[#allocation8 + $0x78] sm:$0xff]
    %vm153 = vcmask 523264
    %v155 = vsel %vm153, 0.0, 0
    %157 = vmatpush.msra.mxu0 0.0
    %158 = vmatpush.msra.mxu0 0.0
    %159 = vmatpush.msra.mxu0 0.0
    %160 = vmatpush.msra.mxu0 0.0
    %161 = vmatpush.msra.mxu0 0.0
    %162 = vmatpush.msra.mxu0 0.0
    %163 = vmatpush.msra.mxu0 0.0
    %164 = vmatpush.msra.mxu0 0.0
    %165 = vmatpush.msra.mxu0 %v151
    %166 = vmatpush.msra.mxu0 %v149
    %167 = vmatpush.msra.mxu0 %v147
    %168 = vmatpush.msra.mxu0 %v145
    %169 = vmatpush.msra.mxu0 %v143
    %170 = vmatpush.msra.mxu0 %v141
    %171 = vmatpush.msra.mxu0 %v139
    %172 = vmatpush.msra.mxu0 %v137
    %173 = vmatmul.f32.gmra.mxu0 %v155
    %v174 = vpop.f32.mrf.mxu0
    %v175 = vadd.f32 0.0, %v174
    %176 = vdwg.mxu0
    %177 = vmatpush.msra.mxu0 0.0
    %178 = vmatpush.msra.mxu0 0.0
    %179 = vmatpush.msra.mxu0 0.0
    %180 = vmatpush.msra.mxu0 0.0
    %181 = vmatpush.msra.mxu0 0.0
    %182 = vmatpush.msra.mxu0 0.0
    %183 = vmatpush.msra.mxu0 0.0
    %184 = vmatpush.msra.mxu0 0.0
    %185 = vmatpush.msra.mxu0 %v152
    %186 = vmatpush.msra.mxu0 %v150
    %187 = vmatpush.msra.mxu0 %v148
    %188 = vmatpush.msra.mxu0 %v146
    %189 = vmatpush.msra.mxu0 %v144
    %190 = vmatpush.msra.mxu0 %v142
    %191 = vmatpush.msra.mxu0 %v140
    %192 = vmatpush.msra.mxu0 %v138
    %193 = vmatmul.f32.gmra.mxu0 %v155
    %v194 = vpop.f32.mrf.mxu0
    %v195 = vadd.f32 0.0, %v194
    %196 = vdwg.mxu0
    %v197 = vld [vmem:[#allocation2] sm:$0x3]
    %v198 = vadd.f32 %v197, %v175
    %v199 = vld [vmem:[#allocation2 + $0x18] sm:$0xc0]
    %v201 = vrot.slane %v195, 2
    %v203 = vadd.f32 %v199, %v201
    %v204 = vxor.u32 %v198, 2147483648
    %v205 = vmul.f32 %v204, 1.442695
    %v206 = vpow.pop %v205
    %v207 = vadd.f32 %v206, 1.0
    %v208 = vrcp.pop %v207
    %v209 = vmul.f32 %v207, %v208
    %v210 = vsub.f32 1.0, %v209
    %v211 = vmul.f32 %v208, %v210
    %v212 = vadd.f32 %v208, %v211
    %vm213 = vweird.f32 %v207
    %vm214 = vweird.f32 %v208
    %vm215 = vmor %vm213, %vm214
    %v216 = vsel %vm215, %v208, %v212
    %v217 = vand.u32 2147483647, %v207
    %vm218 = vcmp.eq.f32.partialorder %v217, 8.507059e+37
    %v219 = vand.u32 %v207, 2147483648
    %v220 = vor.u32 1.1754944e-38, %v219
    %v221 = vsel %vm218, %v220, %v216
    %v222 = vmul.f32 1.0, %v221
    %v223 = vtanh.pop %v198
    %v224 = vmul.f32 %v222, 0.0
    %226 = vrot.lane.b32.xlu0 %v223, 32
    %v227 = vpop.permute.xlu0 %226
    %v229 = vmul.f32 %v222, %v227
    %231 = vrot.lane.b32.xlu0 %v229, 32
    %v232 = vpop.permute.xlu0 %231
    %v234 = vadd.f32 %v224, %v232
    %v235 = vtanh.pop %v234
    %237 = vrot.lane.b32.xlu0 %v235, 32
    %v238 = vpop.permute.xlu0 %237
    %v240 = vmul.f32 %v222, %v238
    %v241 = vxor.u32 %v203, 2147483648
    %v242 = vmul.f32 %v241, 1.442695
    %v243 = vpow.pop %v242
    %v244 = vadd.f32 %v243, 1.0
    %v245 = vrcp.pop %v244
    %v246 = vmul.f32 %v244, %v245
    %v247 = vsub.f32 1.0, %v246
    %v248 = vmul.f32 %v245, %v247
    %v249 = vadd.f32 %v245, %v248
    %vm250 = vweird.f32 %v244
    %vm251 = vweird.f32 %v245
    %vm252 = vmor %vm250, %vm251
    %v253 = vsel %vm252, %v245, %v249
    %v254 = vand.u32 2147483647, %v244
    %vm255 = vcmp.eq.f32.partialorder %v254, 8.507059e+37
    %v256 = vand.u32 %v244, 2147483648
    %v257 = vor.u32 1.1754944e-38, %v256
    %v258 = vsel %vm255, %v257, %v253
    %v259 = vmul.f32 1.0, %v258
    %v260 = vtanh.pop %v203
    %v261 = vmul.f32 %v259, 0.0
    %263 = vrot.lane.b32.xlu0 %v260, 32
    %v264 = vpop.permute.xlu0 %263
    %v266 = vmul.f32 %v259, %v264
    %268 = vrot.lane.b32.xlu0 %v266, 32
    %v269 = vpop.permute.xlu0 %268
    %v271 = vadd.f32 %v261, %v269
    %v272 = vtanh.pop %v271
    %274 = vrot.lane.b32.xlu0 %v272, 32
    %v275 = vpop.permute.xlu0 %274
    %v277 = vmul.f32 %v259, %v275
    %279 = vrot.lane.b32.xlu0 %v240, 64
    %v280 = vpop.permute.xlu0 %279
    %vm282 = vcmask 254976
    %283 = vst.msk [vmem:[#allocation9] sm:$0x3] %vm282, %v280
    %285 = vrot.lane.b32.xlu0 %v277, 64
    %v286 = vpop.permute.xlu0 %285
    %s288 = scalar_lea.vmem [#allocation10], 14
    %vm289 = vcmask 261126
    %290 = vst.msk [vmem:[%s288 - $0x6] sm:$0xc0] %vm289, %v286
    %v291 = vrot.slane %v277, 6
    %292 = vrot.lane.b32.xlu0 %v291, 96
    %v293 = vpop.permute.xlu0 %292
    %vm295 = vcmask 261120
    %v296 = vsel %vm295, %v280, %v293
    %v298 = vsel %vm153, %v296, 0
    %300 = vmatpush.msra.mxu0 0.0
    %301 = vmatpush.msra.mxu0 0.0
    %302 = vmatpush.msra.mxu0 0.0
    %303 = vmatpush.msra.mxu0 0.0
    %304 = vmatpush.msra.mxu0 0.0
    %305 = vmatpush.msra.mxu0 0.0
    %306 = vmatpush.msra.mxu0 0.0
    %307 = vmatpush.msra.mxu0 0.0
    %308 = vmatpush.msra.mxu0 %v151
    %309 = vmatpush.msra.mxu0 %v149
    %310 = vmatpush.msra.mxu0 %v147
    %311 = vmatpush.msra.mxu0 %v145
    %312 = vmatpush.msra.mxu0 %v143
    %313 = vmatpush.msra.mxu0 %v141
    %314 = vmatpush.msra.mxu0 %v139
    %315 = vmatpush.msra.mxu0 %v137
    %316 = vmatmul.f32.gmra.mxu0 %v298
    %v317 = vpop.f32.mrf.mxu0
    %v318 = vadd.f32 0.0, %v317
    %319 = vdwg.mxu0
    %320 = vmatpush.msra.mxu0 0.0
    %321 = vmatpush.msra.mxu0 0.0
    %322 = vmatpush.msra.mxu0 0.0
    %323 = vmatpush.msra.mxu0 0.0
    %324 = vmatpush.msra.mxu0 0.0
    %325 = vmatpush.msra.mxu0 0.0
    %326 = vmatpush.msra.mxu0 0.0
    %327 = vmatpush.msra.mxu0 0.0
    %328 = vmatpush.msra.mxu0 %v152
    %329 = vmatpush.msra.mxu0 %v150
    %330 = vmatpush.msra.mxu0 %v148
    %331 = vmatpush.msra.mxu0 %v146
    %332 = vmatpush.msra.mxu0 %v144
    %333 = vmatpush.msra.mxu0 %v142
    %334 = vmatpush.msra.mxu0 %v140
    %335 = vmatpush.msra.mxu0 %v138
    %336 = vmatmul.f32.gmra.mxu0 %v298
    %v337 = vpop.f32.mrf.mxu0
    %v338 = vadd.f32 0.0, %v337
    %339 = vdwg.mxu0
    %v340 = vld [vmem:[#allocation2] sm:$0xc]
    %v342 = vrot.slane %v318, 6
    %v344 = vadd.f32 %v340, %v342
    %v345 = vld [vmem:[#allocation2 + $0x18] sm:$0x30]
    %v347 = vrot.slane %v338, 4
    %v349 = vadd.f32 %v345, %v347
    %v350 = vxor.u32 %v344, 2147483648
    %v351 = vmul.f32 %v350, 1.442695
    %v352 = vpow.pop %v351
    %v353 = vadd.f32 %v352, 1.0
    %v354 = vrcp.pop %v353
    %v355 = vmul.f32 %v353, %v354
    %v356 = vsub.f32 1.0, %v355
    %v357 = vmul.f32 %v354, %v356
    %v358 = vadd.f32 %v354, %v357
    %vm359 = vweird.f32 %v353
    %vm360 = vweird.f32 %v354
    %vm361 = vmor %vm359, %vm360
    %v362 = vsel %vm361, %v354, %v358
    %v363 = vand.u32 2147483647, %v353
    %vm364 = vcmp.eq.f32.partialorder %v363, 8.507059e+37
    %v365 = vand.u32 %v353, 2147483648
    %v366 = vor.u32 1.1754944e-38, %v365
    %v367 = vsel %vm364, %v366, %v362
    %v368 = vmul.f32 1.0, %v367
    %v369 = vtanh.pop %v344
    %v371 = vrot.slane %v234, 6
    %v373 = vmul.f32 %v368, %v371
    %375 = vrot.lane.b32.xlu0 %v369, 32
    %v376 = vpop.permute.xlu0 %375
    %v378 = vmul.f32 %v368, %v376
    %380 = vrot.lane.b32.xlu0 %v378, 32
    %v381 = vpop.permute.xlu0 %380
    %v383 = vadd.f32 %v373, %v381
    %v384 = vtanh.pop %v383
    %386 = vrot.lane.b32.xlu0 %v384, 32
    %v387 = vpop.permute.xlu0 %386
    %v389 = vmul.f32 %v368, %v387
    %v390 = vxor.u32 %v349, 2147483648
    %v391 = vmul.f32 %v390, 1.442695
    %v392 = vpow.pop %v391
    %v393 = vadd.f32 %v392, 1.0
    %v394 = vrcp.pop %v393
    %v395 = vmul.f32 %v393, %v394
    %v396 = vsub.f32 1.0, %v395
    %v397 = vmul.f32 %v394, %v396
    %v398 = vadd.f32 %v394, %v397
    %vm399 = vweird.f32 %v393
    %vm400 = vweird.f32 %v394
    %vm401 = vmor %vm399, %vm400
    %v402 = vsel %vm401, %v394, %v398
    %v403 = vand.u32 2147483647, %v393
    %vm404 = vcmp.eq.f32.partialorder %v403, 8.507059e+37
    %v405 = vand.u32 %v393, 2147483648
    %v406 = vor.u32 1.1754944e-38, %v405
    %v407 = vsel %vm404, %v406, %v402
    %v408 = vmul.f32 1.0, %v407
    %v409 = vtanh.pop %v349
    %v411 = vrot.slane %v271, 2
    %v413 = vmul.f32 %v408, %v411
    %415 = vrot.lane.b32.xlu0 %v409, 32
    %v416 = vpop.permute.xlu0 %415
    %v418 = vmul.f32 %v408, %v416
    %420 = vrot.lane.b32.xlu0 %v418, 32
    %v421 = vpop.permute.xlu0 %420
    %v423 = vadd.f32 %v413, %v421
    %v424 = vtanh.pop %v423
    %426 = vrot.lane.b32.xlu0 %v424, 32
    %v427 = vpop.permute.xlu0 %426
    %v429 = vmul.f32 %v408, %v427
    %431 = vrot.lane.b32.xlu0 %v389, 64
    %v432 = vpop.permute.xlu0 %431
    %s434 = scalar_lea.vmem [#allocation9], 2
    %vm435 = vcmask 257026
    %436 = vst.msk [vmem:[%s434 - $0x2] sm:$0xc] %vm435, %v432
    %438 = vrot.lane.b32.xlu0 %v429, 64
    %v439 = vpop.permute.xlu0 %438
    %s441 = scalar_lea.vmem [#allocation10], 12
    %vm442 = vcmask 259076
    %443 = vst.msk [vmem:[%s441 - $0x4] sm:$0x30] %vm442, %v439
    %v444 = vrot.slane %v429, 2
    %445 = vrot.lane.b32.xlu0 %v444, 96
    %v446 = vpop.permute.xlu0 %445
    %v448 = vsel %vm295, %v432, %v446
    %v450 = vrot.slane %v448, 2
    %v451 = vsel %vm153, %v450, 0
    %453 = vmatpush.msra.mxu0 0.0
    %454 = vmatpush.msra.mxu0 0.0
    %455 = vmatpush.msra.mxu0 0.0
    %456 = vmatpush.msra.mxu0 0.0
    %457 = vmatpush.msra.mxu0 0.0
    %458 = vmatpush.msra.mxu0 0.0
    %459 = vmatpush.msra.mxu0 0.0
    %460 = vmatpush.msra.mxu0 0.0
    %461 = vmatpush.msra.mxu0 %v151
    %462 = vmatpush.msra.mxu0 %v149
    %463 = vmatpush.msra.mxu0 %v147
    %464 = vmatpush.msra.mxu0 %v145
    %465 = vmatpush.msra.mxu0 %v143
    %466 = vmatpush.msra.mxu0 %v141
    %467 = vmatpush.msra.mxu0 %v139
    %468 = vmatpush.msra.mxu0 %v137
    %469 = vmatmul.f32.gmra.mxu0 %v451
    %v470 = vpop.f32.mrf.mxu0
    %v471 = vadd.f32 0.0, %v470
    %472 = vdwg.mxu0
    %473 = vmatpush.msra.mxu0 0.0
    %474 = vmatpush.msra.mxu0 0.0
    %475 = vmatpush.msra.mxu0 0.0
    %476 = vmatpush.msra.mxu0 0.0
    %477 = vmatpush.msra.mxu0 0.0
    %478 = vmatpush.msra.mxu0 0.0
    %479 = vmatpush.msra.mxu0 0.0
    %480 = vmatpush.msra.mxu0 0.0
    %481 = vmatpush.msra.mxu0 %v152
    %482 = vmatpush.msra.mxu0 %v150
    %483 = vmatpush.msra.mxu0 %v148
    %484 = vmatpush.msra.mxu0 %v146
    %485 = vmatpush.msra.mxu0 %v144
    %486 = vmatpush.msra.mxu0 %v142
    %487 = vmatpush.msra.mxu0 %v140
    %488 = vmatpush.msra.mxu0 %v138
    %489 = vmatmul.f32.gmra.mxu0 %v451
    %v490 = vpop.f32.mrf.mxu0
    %v491 = vadd.f32 0.0, %v490
    %492 = vdwg.mxu0
    %v493 = vld [vmem:[#allocation2] sm:$0x30]
    %v495 = vrot.slane %v471, 4
    %v497 = vadd.f32 %v493, %v495
    %v498 = vld [vmem:[#allocation2 + $0x18] sm:$0xc]
    %v500 = vrot.slane %v491, 6
    %v502 = vadd.f32 %v498, %v500
    %v503 = vxor.u32 %v497, 2147483648
    %v504 = vmul.f32 %v503, 1.442695
    %v505 = vpow.pop %v504
    %v506 = vadd.f32 %v505, 1.0
    %v507 = vrcp.pop %v506
    %v508 = vmul.f32 %v506, %v507
    %v509 = vsub.f32 1.0, %v508
    %v510 = vmul.f32 %v507, %v509
    %v511 = vadd.f32 %v507, %v510
    %vm512 = vweird.f32 %v506
    %vm513 = vweird.f32 %v507
    %vm514 = vmor %vm512, %vm513
    %v515 = vsel %vm514, %v507, %v511
    %v516 = vand.u32 2147483647, %v506
    %vm517 = vcmp.eq.f32.partialorder %v516, 8.507059e+37
    %v518 = vand.u32 %v506, 2147483648
    %v519 = vor.u32 1.1754944e-38, %v518
    %v520 = vsel %vm517, %v519, %v515
    %v521 = vmul.f32 1.0, %v520
    %v522 = vtanh.pop %v497
    %v524 = vrot.slane %v383, 6
    %v526 = vmul.f32 %v521, %v524
    %528 = vrot.lane.b32.xlu0 %v522, 32
    %v529 = vpop.permute.xlu0 %528
    %v531 = vmul.f32 %v521, %v529
    %533 = vrot.lane.b32.xlu0 %v531, 32
    %v534 = vpop.permute.xlu0 %533
    %v536 = vadd.f32 %v526, %v534
    %v537 = vtanh.pop %v536
    %539 = vrot.lane.b32.xlu0 %v537, 32
    %v540 = vpop.permute.xlu0 %539
    %v542 = vmul.f32 %v521, %v540
    %v543 = vxor.u32 %v502, 2147483648
    %v544 = vmul.f32 %v543, 1.442695
    %v545 = vpow.pop %v544
    %v546 = vadd.f32 %v545, 1.0
    %v547 = vrcp.pop %v546
    %v548 = vmul.f32 %v546, %v547
    %v549 = vsub.f32 1.0, %v548
    %v550 = vmul.f32 %v547, %v549
    %v551 = vadd.f32 %v547, %v550
    %vm552 = vweird.f32 %v546
    %vm553 = vweird.f32 %v547
    %vm554 = vmor %vm552, %vm553
    %v555 = vsel %vm554, %v547, %v551
    %v556 = vand.u32 2147483647, %v546
    %vm557 = vcmp.eq.f32.partialorder %v556, 8.507059e+37
    %v558 = vand.u32 %v546, 2147483648
    %v559 = vor.u32 1.1754944e-38, %v558
    %v560 = vsel %vm557, %v559, %v555
    %v561 = vmul.f32 1.0, %v560
    %v562 = vtanh.pop %v502
    %v564 = vrot.slane %v423, 2
    %v566 = vmul.f32 %v561, %v564
    %568 = vrot.lane.b32.xlu0 %v562, 32
    %v569 = vpop.permute.xlu0 %568
    %v571 = vmul.f32 %v561, %v569
    %573 = vrot.lane.b32.xlu0 %v571, 32
    %v574 = vpop.permute.xlu0 %573
    %v576 = vadd.f32 %v566, %v574
    %v577 = vtanh.pop %v576
    %579 = vrot.lane.b32.xlu0 %v577, 32
    %v580 = vpop.permute.xlu0 %579
    %v582 = vmul.f32 %v561, %v580
    %584 = vrot.lane.b32.xlu0 %v542, 64
    %v585 = vpop.permute.xlu0 %584
    %s587 = scalar_lea.vmem [#allocation9], 4
    %588 = vst.msk [vmem:[%s587 - $0x4] sm:$0x30] %vm442, %v585
    %590 = vrot.lane.b32.xlu0 %v582, 64
    %v591 = vpop.permute.xlu0 %590
    %s593 = scalar_lea.vmem [#allocation10], 10
    %594 = vst.msk [vmem:[%s593 - $0x2] sm:$0xc] %vm435, %v591
    %v595 = vrot.slane %v582, 6
    %596 = vrot.lane.b32.xlu0 %v595, 96
    %v597 = vpop.permute.xlu0 %596
    %v599 = vsel %vm295, %v585, %v597
    %v601 = vrot.slane %v599, 4
    %v602 = vsel %vm153, %v601, 0
    %604 = vmatpush.msra.mxu0 0.0
    %605 = vmatpush.msra.mxu0 0.0
    %606 = vmatpush.msra.mxu0 0.0
    %607 = vmatpush.msra.mxu0 0.0
    %608 = vmatpush.msra.mxu0 0.0
    %609 = vmatpush.msra.mxu0 0.0
    %610 = vmatpush.msra.mxu0 0.0
    %611 = vmatpush.msra.mxu0 0.0
    %612 = vmatpush.msra.mxu0 %v151
    %613 = vmatpush.msra.mxu0 %v149
    %614 = vmatpush.msra.mxu0 %v147
    %615 = vmatpush.msra.mxu0 %v145
    %616 = vmatpush.msra.mxu0 %v143
    %617 = vmatpush.msra.mxu0 %v141
    %618 = vmatpush.msra.mxu0 %v139
    %619 = vmatpush.msra.mxu0 %v137
    %620 = vmatmul.f32.gmra.mxu0 %v602
    %v621 = vpop.f32.mrf.mxu0
    %v622 = vadd.f32 0.0, %v621
    %623 = vdwg.mxu0
    %624 = vmatpush.msra.mxu0 0.0
    %625 = vmatpush.msra.mxu0 0.0
    %626 = vmatpush.msra.mxu0 0.0
    %627 = vmatpush.msra.mxu0 0.0
    %628 = vmatpush.msra.mxu0 0.0
    %629 = vmatpush.msra.mxu0 0.0
    %630 = vmatpush.msra.mxu0 0.0
    %631 = vmatpush.msra.mxu0 0.0
    %632 = vmatpush.msra.mxu0 %v152
    %633 = vmatpush.msra.mxu0 %v150
    %634 = vmatpush.msra.mxu0 %v148
    %635 = vmatpush.msra.mxu0 %v146
    %636 = vmatpush.msra.mxu0 %v144
    %637 = vmatpush.msra.mxu0 %v142
    %638 = vmatpush.msra.mxu0 %v140
    %639 = vmatpush.msra.mxu0 %v138
    %640 = vmatmul.f32.gmra.mxu0 %v602
    %v641 = vpop.f32.mrf.mxu0
    %v642 = vadd.f32 0.0, %v641
    %643 = vdwg.mxu0
    %v644 = vld [vmem:[#allocation2] sm:$0xc0]
    %v646 = vrot.slane %v622, 2
    %v648 = vadd.f32 %v644, %v646
    %v649 = vld [vmem:[#allocation2 + $0x18] sm:$0x3]
    %v650 = vadd.f32 %v649, %v642
    %v651 = vxor.u32 %v648, 2147483648
    %v652 = vmul.f32 %v651, 1.442695
    %v653 = vpow.pop %v652
    %v654 = vadd.f32 %v653, 1.0
    %v655 = vrcp.pop %v654
    %v656 = vmul.f32 %v654, %v655
    %v657 = vsub.f32 1.0, %v656
    %v658 = vmul.f32 %v655, %v657
    %v659 = vadd.f32 %v655, %v658
    %vm660 = vweird.f32 %v654
    %vm661 = vweird.f32 %v655
    %vm662 = vmor %vm660, %vm661
    %v663 = vsel %vm662, %v655, %v659
    %v664 = vand.u32 2147483647, %v654
    %vm665 = vcmp.eq.f32.partialorder %v664, 8.507059e+37
    %v666 = vand.u32 %v654, 2147483648
    %v667 = vor.u32 1.1754944e-38, %v666
    %v668 = vsel %vm665, %v667, %v663
    %v669 = vmul.f32 1.0, %v668
    %v670 = vtanh.pop %v648
    %v672 = vrot.slane %v536, 6
    %v674 = vmul.f32 %v669, %v672
    %676 = vrot.lane.b32.xlu0 %v670, 32
    %v677 = vpop.permute.xlu0 %676
    %v679 = vmul.f32 %v669, %v677
    %681 = vrot.lane.b32.xlu0 %v679, 32
    %v682 = vpop.permute.xlu0 %681
    %v684 = vadd.f32 %v674, %v682
    %v685 = vtanh.pop %v684
    %687 = vrot.lane.b32.xlu0 %v685, 32
    %v688 = vpop.permute.xlu0 %687
    %v690 = vmul.f32 %v669, %v688
    %v691 = vxor.u32 %v650, 2147483648
    %v692 = vmul.f32 %v691, 1.442695
    %v693 = vpow.pop %v692
    %v694 = vadd.f32 %v693, 1.0
    %v695 = vrcp.pop %v694
    %v696 = vmul.f32 %v694, %v695
    %v697 = vsub.f32 1.0, %v696
    %v698 = vmul.f32 %v695, %v697
    %v699 = vadd.f32 %v695, %v698
    %vm700 = vweird.f32 %v694
    %vm701 = vweird.f32 %v695
    %vm702 = vmor %vm700, %vm701
    %v703 = vsel %vm702, %v695, %v699
    %v704 = vand.u32 2147483647, %v694
    %vm705 = vcmp.eq.f32.partialorder %v704, 8.507059e+37
    %v706 = vand.u32 %v694, 2147483648
    %v707 = vor.u32 1.1754944e-38, %v706
    %v708 = vsel %vm705, %v707, %v703
    %v709 = vmul.f32 1.0, %v708
    %v710 = vtanh.pop %v650
    %v712 = vrot.slane %v576, 2
    %v714 = vmul.f32 %v709, %v712
    %716 = vrot.lane.b32.xlu0 %v710, 32
    %v717 = vpop.permute.xlu0 %716
    %v719 = vmul.f32 %v709, %v717
    %721 = vrot.lane.b32.xlu0 %v719, 32
    %v722 = vpop.permute.xlu0 %721
    %v724 = vadd.f32 %v714, %v722
    %v725 = vtanh.pop %v724
    %727 = vrot.lane.b32.xlu0 %v725, 32
    %v728 = vpop.permute.xlu0 %727
    %v730 = vmul.f32 %v709, %v728
    %732 = vrot.lane.b32.xlu0 %v690, 64
    %v733 = vpop.permute.xlu0 %732
    %s735 = scalar_lea.vmem [#allocation9], 6
    %736 = vst.msk [vmem:[%s735 - $0x6] sm:$0xc0] %vm289, %v733
    %738 = vrot.lane.b32.xlu0 %v730, 64
    %v739 = vpop.permute.xlu0 %738
    %s741 = scalar_lea.vmem [#allocation10], 8
    %742 = vst.msk [vmem:[%s741] sm:$0x3] %vm282, %v739
    %v743 = vrot.slane %v730, 2
    %744 = vrot.lane.b32.xlu0 %v743, 96
    %v745 = vpop.permute.xlu0 %744
    %v747 = vsel %vm295, %v733, %v745
    %v749 = vrot.slane %v747, 6
    %v750 = vsel %vm153, %v749, 0
    %752 = vmatpush.msra.mxu0 0.0
    %753 = vmatpush.msra.mxu0 0.0
    %754 = vmatpush.msra.mxu0 0.0
    %755 = vmatpush.msra.mxu0 0.0
    %756 = vmatpush.msra.mxu0 0.0
    %757 = vmatpush.msra.mxu0 0.0
    %758 = vmatpush.msra.mxu0 0.0
    %759 = vmatpush.msra.mxu0 0.0
    %760 = vmatpush.msra.mxu0 %v151
    %761 = vmatpush.msra.mxu0 %v149
    %762 = vmatpush.msra.mxu0 %v147
    %763 = vmatpush.msra.mxu0 %v145
    %764 = vmatpush.msra.mxu0 %v143
    %765 = vmatpush.msra.mxu0 %v141
    %766 = vmatpush.msra.mxu0 %v139
    %767 = vmatpush.msra.mxu0 %v137
    %768 = vmatmul.f32.gmra.mxu0 %v750
    %v769 = vpop.f32.mrf.mxu0
    %v770 = vadd.f32 0.0, %v769
    %771 = vdwg.mxu0
    %772 = vmatpush.msra.mxu0 0.0
    %773 = vmatpush.msra.mxu0 0.0
    %774 = vmatpush.msra.mxu0 0.0
    %775 = vmatpush.msra.mxu0 0.0
    %776 = vmatpush.msra.mxu0 0.0
    %777 = vmatpush.msra.mxu0 0.0
    %778 = vmatpush.msra.mxu0 0.0
    %779 = vmatpush.msra.mxu0 0.0
    %780 = vmatpush.msra.mxu0 %v152
    %781 = vmatpush.msra.mxu0 %v150
    %782 = vmatpush.msra.mxu0 %v148
    %783 = vmatpush.msra.mxu0 %v146
    %784 = vmatpush.msra.mxu0 %v144
    %785 = vmatpush.msra.mxu0 %v142
    %786 = vmatpush.msra.mxu0 %v140
    %787 = vmatpush.msra.mxu0 %v138
    %788 = vmatmul.f32.gmra.mxu0 %v750
    %v789 = vpop.f32.mrf.mxu0
    %v790 = vadd.f32 0.0, %v789
    %791 = vdwg.mxu0
    %v792 = vld [vmem:[#allocation2 + $0x10] sm:$0x3]
    %v793 = vadd.f32 %v792, %v770
    %v794 = vld [vmem:[#allocation2 + $0x8] sm:$0xc0]
    %v796 = vrot.slane %v790, 2
    %v798 = vadd.f32 %v794, %v796
    %v799 = vxor.u32 %v793, 2147483648
    %v800 = vmul.f32 %v799, 1.442695
    %v801 = vpow.pop %v800
    %v802 = vadd.f32 %v801, 1.0
    %v803 = vrcp.pop %v802
    %v804 = vmul.f32 %v802, %v803
    %v805 = vsub.f32 1.0, %v804
    %v806 = vmul.f32 %v803, %v805
    %v807 = vadd.f32 %v803, %v806
    %vm808 = vweird.f32 %v802
    %vm809 = vweird.f32 %v803
    %vm810 = vmor %vm808, %vm809
    %v811 = vsel %vm810, %v803, %v807
    %v812 = vand.u32 2147483647, %v802
    %vm813 = vcmp.eq.f32.partialorder %v812, 8.507059e+37
    %v814 = vand.u32 %v802, 2147483648
    %v815 = vor.u32 1.1754944e-38, %v814
    %v816 = vsel %vm813, %v815, %v811
    %v817 = vmul.f32 1.0, %v816
    %v818 = vtanh.pop %v793
    %v820 = vrot.slane %v684, 6
    %v822 = vmul.f32 %v817, %v820
    %824 = vrot.lane.b32.xlu0 %v818, 32
    %v825 = vpop.permute.xlu0 %824
    %v827 = vmul.f32 %v817, %v825
    %829 = vrot.lane.b32.xlu0 %v827, 32
    %v830 = vpop.permute.xlu0 %829
    %v832 = vadd.f32 %v822, %v830
    %v833 = vtanh.pop %v832
    %835 = vrot.lane.b32.xlu0 %v833, 32
    %v836 = vpop.permute.xlu0 %835
    %v838 = vmul.f32 %v817, %v836
    %v839 = vxor.u32 %v798, 2147483648
    %v840 = vmul.f32 %v839, 1.442695
    %v841 = vpow.pop %v840
    %v842 = vadd.f32 %v841, 1.0
    %v843 = vrcp.pop %v842
    %v844 = vmul.f32 %v842, %v843
    %v845 = vsub.f32 1.0, %v844
    %v846 = vmul.f32 %v843, %v845
    %v847 = vadd.f32 %v843, %v846
    %vm848 = vweird.f32 %v842
    %vm849 = vweird.f32 %v843
    %vm850 = vmor %vm848, %vm849
    %v851 = vsel %vm850, %v843, %v847
    %v852 = vand.u32 2147483647, %v842
    %vm853 = vcmp.eq.f32.partialorder %v852, 8.507059e+37
    %v854 = vand.u32 %v842, 2147483648
    %v855 = vor.u32 1.1754944e-38, %v854
    %v856 = vsel %vm853, %v855, %v851
    %v857 = vmul.f32 1.0, %v856
    %v858 = vtanh.pop %v798
    %v860 = vrot.slane %v724, 2
    %v862 = vmul.f32 %v857, %v860
    %864 = vrot.lane.b32.xlu0 %v858, 32
    %v865 = vpop.permute.xlu0 %864
    %v867 = vmul.f32 %v857, %v865
    %869 = vrot.lane.b32.xlu0 %v867, 32
    %v870 = vpop.permute.xlu0 %869
    %v872 = vadd.f32 %v862, %v870
    %v873 = vtanh.pop %v872
    %875 = vrot.lane.b32.xlu0 %v873, 32
    %v876 = vpop.permute.xlu0 %875
    %v878 = vmul.f32 %v857, %v876
    %880 = vrot.lane.b32.xlu0 %v838, 64
    %v881 = vpop.permute.xlu0 %880
    %s883 = scalar_lea.vmem [#allocation9], 8
    %884 = vst.msk [vmem:[%s883] sm:$0x3] %vm282, %v881
    %886 = vrot.lane.b32.xlu0 %v878, 64
    %v887 = vpop.permute.xlu0 %886
    %s889 = scalar_lea.vmem [#allocation10], 6
    %890 = vst.msk [vmem:[%s889 - $0x6] sm:$0xc0] %vm289, %v887
    %v891 = vrot.slane %v878, 6
    %892 = vrot.lane.b32.xlu0 %v891, 96
    %v893 = vpop.permute.xlu0 %892
    %v895 = vsel %vm295, %v881, %v893
    %v897 = vsel %vm153, %v895, 0
    %899 = vmatpush.msra.mxu0 0.0
    %900 = vmatpush.msra.mxu0 0.0
    %901 = vmatpush.msra.mxu0 0.0
    %902 = vmatpush.msra.mxu0 0.0
    %903 = vmatpush.msra.mxu0 0.0
    %904 = vmatpush.msra.mxu0 0.0
    %905 = vmatpush.msra.mxu0 0.0
    %906 = vmatpush.msra.mxu0 0.0
    %907 = vmatpush.msra.mxu0 %v151
    %908 = vmatpush.msra.mxu0 %v149
    %909 = vmatpush.msra.mxu0 %v147
    %910 = vmatpush.msra.mxu0 %v145
    %911 = vmatpush.msra.mxu0 %v143
    %912 = vmatpush.msra.mxu0 %v141
    %913 = vmatpush.msra.mxu0 %v139
    %914 = vmatpush.msra.mxu0 %v137
    %915 = vmatmul.f32.gmra.mxu0 %v897
    %v916 = vpop.f32.mrf.mxu0
    %v917 = vadd.f32 0.0, %v916
    %918 = vdwg.mxu0
    %919 = vmatpush.msra.mxu0 0.0
    %920 = vmatpush.msra.mxu0 0.0
    %921 = vmatpush.msra.mxu0 0.0
    %922 = vmatpush.msra.mxu0 0.0
    %923 = vmatpush.msra.mxu0 0.0
    %924 = vmatpush.msra.mxu0 0.0
    %925 = vmatpush.msra.mxu0 0.0
    %926 = vmatpush.msra.mxu0 0.0
    %927 = vmatpush.msra.mxu0 %v152
    %928 = vmatpush.msra.mxu0 %v150
    %929 = vmatpush.msra.mxu0 %v148
    %930 = vmatpush.msra.mxu0 %v146
    %931 = vmatpush.msra.mxu0 %v144
    %932 = vmatpush.msra.mxu0 %v142
    %933 = vmatpush.msra.mxu0 %v140
    %934 = vmatpush.msra.mxu0 %v138
    %935 = vmatmul.f32.gmra.mxu0 %v897
    %v936 = vpop.f32.mrf.mxu0
    %v937 = vadd.f32 0.0, %v936
    %938 = vdwg.mxu0
    %v939 = vld [vmem:[#allocation2 + $0x10] sm:$0xc]
    %v941 = vrot.slane %v917, 6
    %v943 = vadd.f32 %v939, %v941
    %v944 = vld [vmem:[#allocation2 + $0x8] sm:$0x30]
    %v946 = vrot.slane %v937, 4
    %v948 = vadd.f32 %v944, %v946
    %v949 = vxor.u32 %v943, 2147483648
    %v950 = vmul.f32 %v949, 1.442695
    %v951 = vpow.pop %v950
    %v952 = vadd.f32 %v951, 1.0
    %v953 = vrcp.pop %v952
    %v954 = vmul.f32 %v952, %v953
    %v955 = vsub.f32 1.0, %v954
    %v956 = vmul.f32 %v953, %v955
    %v957 = vadd.f32 %v953, %v956
    %vm958 = vweird.f32 %v952
    %vm959 = vweird.f32 %v953
    %vm960 = vmor %vm958, %vm959
    %v961 = vsel %vm960, %v953, %v957
    %v962 = vand.u32 2147483647, %v952
    %vm963 = vcmp.eq.f32.partialorder %v962, 8.507059e+37
    %v964 = vand.u32 %v952, 2147483648
    %v965 = vor.u32 1.1754944e-38, %v964
    %v966 = vsel %vm963, %v965, %v961
    %v967 = vmul.f32 1.0, %v966
    %v968 = vtanh.pop %v943
    %v970 = vrot.slane %v832, 6
    %v972 = vmul.f32 %v967, %v970
    %974 = vrot.lane.b32.xlu0 %v968, 32
    %v975 = vpop.permute.xlu0 %974
    %v977 = vmul.f32 %v967, %v975
    %979 = vrot.lane.b32.xlu0 %v977, 32
    %v980 = vpop.permute.xlu0 %979
    %v982 = vadd.f32 %v972, %v980
    %v983 = vtanh.pop %v982
    %985 = vrot.lane.b32.xlu0 %v983, 32
    %v986 = vpop.permute.xlu0 %985
    %v988 = vmul.f32 %v967, %v986
    %v989 = vxor.u32 %v948, 2147483648
    %v990 = vmul.f32 %v989, 1.442695
    %v991 = vpow.pop %v990
    %v992 = vadd.f32 %v991, 1.0
    %v993 = vrcp.pop %v992
    %v994 = vmul.f32 %v992, %v993
    %v995 = vsub.f32 1.0, %v994
    %v996 = vmul.f32 %v993, %v995
    %v997 = vadd.f32 %v993, %v996
    %vm998 = vweird.f32 %v992
    %vm999 = vweird.f32 %v993
    %vm1000 = vmor %vm998, %vm999
    %v1001 = vsel %vm1000, %v993, %v997
    %v1002 = vand.u32 2147483647, %v992
    %vm1003 = vcmp.eq.f32.partialorder %v1002, 8.507059e+37
    %v1004 = vand.u32 %v992, 2147483648
    %v1005 = vor.u32 1.1754944e-38, %v1004
    %v1006 = vsel %vm1003, %v1005, %v1001
    %v1007 = vmul.f32 1.0, %v1006
    %v1008 = vtanh.pop %v948
    %v1010 = vrot.slane %v872, 2
    %v1012 = vmul.f32 %v1007, %v1010
    %1014 = vrot.lane.b32.xlu0 %v1008, 32
    %v1015 = vpop.permute.xlu0 %1014
    %v1017 = vmul.f32 %v1007, %v1015
    %1019 = vrot.lane.b32.xlu0 %v1017, 32
    %v1020 = vpop.permute.xlu0 %1019
    %v1022 = vadd.f32 %v1012, %v1020
    %v1023 = vtanh.pop %v1022
    %1025 = vrot.lane.b32.xlu0 %v1023, 32
    %v1026 = vpop.permute.xlu0 %1025
    %v1028 = vmul.f32 %v1007, %v1026
    %1030 = vrot.lane.b32.xlu0 %v988, 64
    %v1031 = vpop.permute.xlu0 %1030
    %s1033 = scalar_lea.vmem [#allocation9], 10
    %1034 = vst.msk [vmem:[%s1033 - $0x2] sm:$0xc] %vm435, %v1031
    %1036 = vrot.lane.b32.xlu0 %v1028, 64
    %v1037 = vpop.permute.xlu0 %1036
    %s1039 = scalar_lea.vmem [#allocation10], 4
    %1040 = vst.msk [vmem:[%s1039 - $0x4] sm:$0x30] %vm442, %v1037
    %v1041 = vrot.slane %v1028, 2
    %1042 = vrot.lane.b32.xlu0 %v1041, 96
    %v1043 = vpop.permute.xlu0 %1042
    %v1045 = vsel %vm295, %v1031, %v1043
    %v1047 = vrot.slane %v1045, 2
    %v1048 = vsel %vm153, %v1047, 0
    %1050 = vmatpush.msra.mxu0 0.0
    %1051 = vmatpush.msra.mxu0 0.0
    %1052 = vmatpush.msra.mxu0 0.0
    %1053 = vmatpush.msra.mxu0 0.0
    %1054 = vmatpush.msra.mxu0 0.0
    %1055 = vmatpush.msra.mxu0 0.0
    %1056 = vmatpush.msra.mxu0 0.0
    %1057 = vmatpush.msra.mxu0 0.0
    %1058 = vmatpush.msra.mxu0 %v151
    %1059 = vmatpush.msra.mxu0 %v149
    %1060 = vmatpush.msra.mxu0 %v147
    %1061 = vmatpush.msra.mxu0 %v145
    %1062 = vmatpush.msra.mxu0 %v143
    %1063 = vmatpush.msra.mxu0 %v141
    %1064 = vmatpush.msra.mxu0 %v139
    %1065 = vmatpush.msra.mxu0 %v137
    %1066 = vmatmul.f32.gmra.mxu0 %v1048
    %v1067 = vpop.f32.mrf.mxu0
    %v1068 = vadd.f32 0.0, %v1067
    %1069 = vdwg.mxu0
    %1070 = vmatpush.msra.mxu0 0.0
    %1071 = vmatpush.msra.mxu0 0.0
    %1072 = vmatpush.msra.mxu0 0.0
    %1073 = vmatpush.msra.mxu0 0.0
    %1074 = vmatpush.msra.mxu0 0.0
    %1075 = vmatpush.msra.mxu0 0.0
    %1076 = vmatpush.msra.mxu0 0.0
    %1077 = vmatpush.msra.mxu0 0.0
    %1078 = vmatpush.msra.mxu0 %v152
    %1079 = vmatpush.msra.mxu0 %v150
    %1080 = vmatpush.msra.mxu0 %v148
    %1081 = vmatpush.msra.mxu0 %v146
    %1082 = vmatpush.msra.mxu0 %v144
    %1083 = vmatpush.msra.mxu0 %v142
    %1084 = vmatpush.msra.mxu0 %v140
    %1085 = vmatpush.msra.mxu0 %v138
    %1086 = vmatmul.f32.gmra.mxu0 %v1048
    %v1087 = vpop.f32.mrf.mxu0
    %v1088 = vadd.f32 0.0, %v1087
    %1089 = vdwg.mxu0
    %v1090 = vld [vmem:[#allocation2 + $0x10] sm:$0x30]
    %v1092 = vrot.slane %v1068, 4
    %v1094 = vadd.f32 %v1090, %v1092
    %v1095 = vld [vmem:[#allocation2 + $0x8] sm:$0xc]
    %v1097 = vrot.slane %v1088, 6
    %v1099 = vadd.f32 %v1095, %v1097
    %v1100 = vxor.u32 %v1094, 2147483648
    %v1101 = vmul.f32 %v1100, 1.442695
    %v1102 = vpow.pop %v1101
    %v1103 = vadd.f32 %v1102, 1.0
    %v1104 = vrcp.pop %v1103
    %v1105 = vmul.f32 %v1103, %v1104
    %v1106 = vsub.f32 1.0, %v1105
    %v1107 = vmul.f32 %v1104, %v1106
    %v1108 = vadd.f32 %v1104, %v1107
    %vm1109 = vweird.f32 %v1103
    %vm1110 = vweird.f32 %v1104
    %vm1111 = vmor %vm1109, %vm1110
    %v1112 = vsel %vm1111, %v1104, %v1108
    %v1113 = vand.u32 2147483647, %v1103
    %vm1114 = vcmp.eq.f32.partialorder %v1113, 8.507059e+37
    %v1115 = vand.u32 %v1103, 2147483648
    %v1116 = vor.u32 1.1754944e-38, %v1115
    %v1117 = vsel %vm1114, %v1116, %v1112
    %v1118 = vmul.f32 1.0, %v1117
    %v1119 = vtanh.pop %v1094
    %v1121 = vrot.slane %v982, 6
    %v1123 = vmul.f32 %v1118, %v1121
    %1125 = vrot.lane.b32.xlu0 %v1119, 32
    %v1126 = vpop.permute.xlu0 %1125
    %v1128 = vmul.f32 %v1118, %v1126
    %1130 = vrot.lane.b32.xlu0 %v1128, 32
    %v1131 = vpop.permute.xlu0 %1130
    %v1133 = vadd.f32 %v1123, %v1131
    %v1134 = vtanh.pop %v1133
    %1136 = vrot.lane.b32.xlu0 %v1134, 32
    %v1137 = vpop.permute.xlu0 %1136
    %v1139 = vmul.f32 %v1118, %v1137
    %v1140 = vxor.u32 %v1099, 2147483648
    %v1141 = vmul.f32 %v1140, 1.442695
    %v1142 = vpow.pop %v1141
    %v1143 = vadd.f32 %v1142, 1.0
    %v1144 = vrcp.pop %v1143
    %v1145 = vmul.f32 %v1143, %v1144
    %v1146 = vsub.f32 1.0, %v1145
    %v1147 = vmul.f32 %v1144, %v1146
    %v1148 = vadd.f32 %v1144, %v1147
    %vm1149 = vweird.f32 %v1143
    %vm1150 = vweird.f32 %v1144
    %vm1151 = vmor %vm1149, %vm1150
    %v1152 = vsel %vm1151, %v1144, %v1148
    %v1153 = vand.u32 2147483647, %v1143
    %vm1154 = vcmp.eq.f32.partialorder %v1153, 8.507059e+37
    %v1155 = vand.u32 %v1143, 2147483648
    %v1156 = vor.u32 1.1754944e-38, %v1155
    %v1157 = vsel %vm1154, %v1156, %v1152
    %v1158 = vmul.f32 1.0, %v1157
    %v1159 = vtanh.pop %v1099
    %v1161 = vrot.slane %v1022, 2
    %v1163 = vmul.f32 %v1158, %v1161
    %1165 = vrot.lane.b32.xlu0 %v1159, 32
    %v1166 = vpop.permute.xlu0 %1165
    %v1168 = vmul.f32 %v1158, %v1166
    %1170 = vrot.lane.b32.xlu0 %v1168, 32
    %v1171 = vpop.permute.xlu0 %1170
    %v1173 = vadd.f32 %v1163, %v1171
    %v1174 = vtanh.pop %v1173
    %1176 = vrot.lane.b32.xlu0 %v1174, 32
    %v1177 = vpop.permute.xlu0 %1176
    %v1179 = vmul.f32 %v1158, %v1177
    %1181 = vrot.lane.b32.xlu0 %v1139, 64
    %v1182 = vpop.permute.xlu0 %1181
    %s1184 = scalar_lea.vmem [#allocation9], 12
    %1185 = vst.msk [vmem:[%s1184 - $0x4] sm:$0x30] %vm442, %v1182
    %1187 = vrot.lane.b32.xlu0 %v1179, 64
    %v1188 = vpop.permute.xlu0 %1187
    %s1190 = scalar_lea.vmem [#allocation10], 2
    %1191 = vst.msk [vmem:[%s1190 - $0x2] sm:$0xc] %vm435, %v1188
    %v1192 = vrot.slane %v1179, 6
    %1193 = vrot.lane.b32.xlu0 %v1192, 96
    %v1194 = vpop.permute.xlu0 %1193
    %v1196 = vsel %vm295, %v1182, %v1194
    %v1198 = vrot.slane %v1196, 4
    %v1199 = vsel %vm153, %v1198, 0
    %1201 = vmatpush.msra.mxu0 0.0
    %1202 = vmatpush.msra.mxu0 0.0
    %1203 = vmatpush.msra.mxu0 0.0
    %1204 = vmatpush.msra.mxu0 0.0
    %1205 = vmatpush.msra.mxu0 0.0
    %1206 = vmatpush.msra.mxu0 0.0
    %1207 = vmatpush.msra.mxu0 0.0
    %1208 = vmatpush.msra.mxu0 0.0
    %1209 = vmatpush.msra.mxu0 %v151
    %1210 = vmatpush.msra.mxu0 %v149
    %1211 = vmatpush.msra.mxu0 %v147
    %1212 = vmatpush.msra.mxu0 %v145
    %1213 = vmatpush.msra.mxu0 %v143
    %1214 = vmatpush.msra.mxu0 %v141
    %1215 = vmatpush.msra.mxu0 %v139
    %1216 = vmatpush.msra.mxu0 %v137
    %1217 = vmatmul.f32.gmra.mxu0 %v1199
    %v1218 = vpop.f32.mrf.mxu0
    %v1219 = vadd.f32 0.0, %v1218
    %1220 = vdwg.mxu0
    %1221 = vmatpush.msra.mxu0 0.0
    %1222 = vmatpush.msra.mxu0 0.0
    %1223 = vmatpush.msra.mxu0 0.0
    %1224 = vmatpush.msra.mxu0 0.0
    %1225 = vmatpush.msra.mxu0 0.0
    %1226 = vmatpush.msra.mxu0 0.0
    %1227 = vmatpush.msra.mxu0 0.0
    %1228 = vmatpush.msra.mxu0 0.0
    %1229 = vmatpush.msra.mxu0 %v152
    %1230 = vmatpush.msra.mxu0 %v150
    %1231 = vmatpush.msra.mxu0 %v148
    %1232 = vmatpush.msra.mxu0 %v146
    %1233 = vmatpush.msra.mxu0 %v144
    %1234 = vmatpush.msra.mxu0 %v142
    %1235 = vmatpush.msra.mxu0 %v140
    %1236 = vmatpush.msra.mxu0 %v138
    %1237 = vmatmul.f32.gmra.mxu0 %v1199
    %v1238 = vpop.f32.mrf.mxu0
    %v1239 = vadd.f32 0.0, %v1238
    %1240 = vdwg.mxu0
    %v1241 = vld [vmem:[#allocation2 + $0x10] sm:$0xc0]
    %v1243 = vrot.slane %v1219, 2
    %v1245 = vadd.f32 %v1241, %v1243
    %v1246 = vld [vmem:[#allocation2 + $0x8] sm:$0x3]
    %v1247 = vadd.f32 %v1246, %v1239
    %v1248 = vxor.u32 %v1245, 2147483648
    %v1249 = vmul.f32 %v1248, 1.442695
    %v1250 = vpow.pop %v1249
    %v1251 = vadd.f32 %v1250, 1.0
    %v1252 = vrcp.pop %v1251
    %v1253 = vmul.f32 %v1251, %v1252
    %v1254 = vsub.f32 1.0, %v1253
    %v1255 = vmul.f32 %v1252, %v1254
    %v1256 = vadd.f32 %v1252, %v1255
    %vm1257 = vweird.f32 %v1251
    %vm1258 = vweird.f32 %v1252
    %vm1259 = vmor %vm1257, %vm1258
    %v1260 = vsel %vm1259, %v1252, %v1256
    %v1261 = vand.u32 2147483647, %v1251
    %vm1262 = vcmp.eq.f32.partialorder %v1261, 8.507059e+37
    %v1263 = vand.u32 %v1251, 2147483648
    %v1264 = vor.u32 1.1754944e-38, %v1263
    %v1265 = vsel %vm1262, %v1264, %v1260
    %v1266 = vmul.f32 1.0, %v1265
    %v1267 = vtanh.pop %v1245
    %v1269 = vrot.slane %v1133, 6
    %v1271 = vmul.f32 %v1266, %v1269
    %1273 = vrot.lane.b32.xlu0 %v1267, 32
    %v1274 = vpop.permute.xlu0 %1273
    %v1276 = vmul.f32 %v1266, %v1274
    %1278 = vrot.lane.b32.xlu0 %v1276, 32
    %v1279 = vpop.permute.xlu0 %1278
    %v1281 = vadd.f32 %v1271, %v1279
    %v1282 = vtanh.pop %v1281
    %1284 = vrot.lane.b32.xlu0 %v1282, 32
    %v1285 = vpop.permute.xlu0 %1284
    %v1287 = vmul.f32 %v1266, %v1285
    %v1288 = vxor.u32 %v1247, 2147483648
    %v1289 = vmul.f32 %v1288, 1.442695
    %v1290 = vpow.pop %v1289
    %v1291 = vadd.f32 %v1290, 1.0
    %v1292 = vrcp.pop %v1291
    %v1293 = vmul.f32 %v1291, %v1292
    %v1294 = vsub.f32 1.0, %v1293
    %v1295 = vmul.f32 %v1292, %v1294
    %v1296 = vadd.f32 %v1292, %v1295
    %vm1297 = vweird.f32 %v1291
    %vm1298 = vweird.f32 %v1292
    %vm1299 = vmor %vm1297, %vm1298
    %v1300 = vsel %vm1299, %v1292, %v1296
    %v1301 = vand.u32 2147483647, %v1291
    %vm1302 = vcmp.eq.f32.partialorder %v1301, 8.507059e+37
    %v1303 = vand.u32 %v1291, 2147483648
    %v1304 = vor.u32 1.1754944e-38, %v1303
    %v1305 = vsel %vm1302, %v1304, %v1300
    %v1306 = vmul.f32 1.0, %v1305
    %v1307 = vtanh.pop %v1247
    %v1309 = vrot.slane %v1173, 2
    %v1311 = vmul.f32 %v1306, %v1309
    %1313 = vrot.lane.b32.xlu0 %v1307, 32
    %v1314 = vpop.permute.xlu0 %1313
    %v1316 = vmul.f32 %v1306, %v1314
    %1318 = vrot.lane.b32.xlu0 %v1316, 32
    %v1319 = vpop.permute.xlu0 %1318
    %v1321 = vadd.f32 %v1311, %v1319
    %v1322 = vtanh.pop %v1321
    %1324 = vrot.lane.b32.xlu0 %v1322, 32
    %v1325 = vpop.permute.xlu0 %1324
    %v1327 = vmul.f32 %v1306, %v1325
    %1329 = vrot.lane.b32.xlu0 %v1287, 64
    %v1330 = vpop.permute.xlu0 %1329
    %s1332 = scalar_lea.vmem [#allocation9], 14
    %1333 = vst.msk [vmem:[%s1332 - $0x6] sm:$0xc0] %vm289, %v1330
    %1335 = vrot.lane.b32.xlu0 %v1327, 64
    %v1336 = vpop.permute.xlu0 %1335
    %1338 = vst.msk [vmem:[#allocation10] sm:$0x3] %vm282, %v1336
    // Predicated region
    $region30: #{tpu_custom_call.1} parent=1 // pred_check
      _
    $region31: #{tpu_custom_call.1} parent=1 // pred_check_branch
      %1340 = sbr.rel (0) target = $region33
    $region32: #{tpu_custom_call.1} parent=1 // pred_region
      %1342 = vsyncadd [#allocation5], 0
      %s1343 = sshll.u32 [#allocation9], 4
      %s1344 = int_to_ptr.vmem [resolvable:$true] %s1343
      %s1345 = sshll.u32 %s4, 4
      %s1346 = int_to_ptr.hbm [resolvable:$true] %s1345
      %1351 = dma.vmem_to_hbm [thread:$0]  %s1344, 256, %s1346, [#allocation5], 32, 32, 2
    $region33: #{tpu_custom_call.1} parent=1 // pred_fallthru
      _
    // Predicated region
    $region34: #{tpu_custom_call.1} parent=1 // pred_check
      _
    $region35: #{tpu_custom_call.1} parent=1 // pred_check_branch
      %1353 = sbr.rel (0) target = $region37
    $region36: #{tpu_custom_call.1} parent=1 // pred_region
      %1355 = vsyncadd [#allocation11], 0
      %s1356 = sshll.u32 [#allocation10], 4
      %s1357 = int_to_ptr.vmem [resolvable:$true] %s1356
      %s1358 = sshll.u32 %s5, 4
      %s1359 = int_to_ptr.hbm [resolvable:$true] %s1358
      %1364 = dma.vmem_to_hbm [thread:$0]  %s1357, 256, %s1359, [#allocation11], 32, 32, 2
    $region37: #{tpu_custom_call.1} parent=1 // pred_fallthru
      _
    // Predicated region
    $region38: #{tpu_custom_call.1} parent=1 // pred_check
      _
    $region39: #{tpu_custom_call.1} parent=1 // pred_check_branch
      %1366 = sbr.rel (0) target = $region41
    $region40: #{tpu_custom_call.1} parent=1 // pred_region
      %1368 = dma.done [#allocation5], 256
    $region41: #{tpu_custom_call.1} parent=1 // pred_fallthru
      _
    // Predicated region
    $region42: #{tpu_custom_call.1} parent=1 // pred_check
      _
    $region43: #{tpu_custom_call.1} parent=1 // pred_check_branch
      %1370 = sbr.rel (0) target = $region45
    $region44: #{tpu_custom_call.1} parent=1 // pred_region
      %1372 = dma.done [#allocation11], 256
    $region45: #{tpu_custom_call.1} parent=1 // pred_fallthru
      _
    %1373 = vsyncpa [#allocation4], 1
    %1374 = vsyncpa [#allocation7], 1
    %1375 = vsyncpa [#allocation5], 1
    %1376 = vsyncpa [#allocation11], 1

</llo_original>
